<compile_context>
chip_gen: v5e
topology: v5e:2x2
jax: 0.10.0
libtpu: 0.0.40
codegen_flags: <defaults>
</compile_context>

<pallas_src>
import functools

import jax
import jax.numpy as jnp
from jax.experimental import pallas as pl
from jax.experimental.pallas import tpu as pltpu


def _bow_lstm_kernel(x_ref, len_ref, wih_ref, whh_ref, b_ref, wfcb_ref, bfcb_ref,
                     out_ref, hn_ref, cn_ref, h_sc, c_sc, *, hidden_dim, ts):
    H = hidden_dim
    bt = h_sc.shape[0]
    c_idx = pl.program_id(1)                 # time-chunk index (inner, sequential)

    @pl.when(c_idx == 0)
    def _init():
        h_sc[...] = jnp.zeros_like(h_sc)
        c_sc[...] = jnp.zeros_like(c_sc)

    # Bulk input projection for the whole chunk: one large MXU push, off the
    # serial recurrence path.  (ts*bt, D) @ (D, 4H) -> (ts*bt, 4H)
    d_in = x_ref.shape[-1]
    x_chunk = x_ref[...].reshape(ts * bt, d_in)
    xw = jnp.dot(x_chunk, wih_ref[...], preferred_element_type=jnp.float32)

    whh = whh_ref[...]                       # (H, 4H)
    bias = b_ref[...]                        # (1, 4H)
    lens = len_ref[...]                      # (bt, 1) int32

    # Fused-activation bookkeeping, hoisted out of the time loop.
    col = jax.lax.broadcasted_iota(jnp.int32, (bt, 4 * H), 1)
    is_g = (col >= 2 * H) & (col < 3 * H)    # g-gate columns use plain tanh
    scale = jnp.where(is_g, 1.0, 0.5)

    h = h_sc[...]
    c = c_sc[...]
    h_outs = []
    for t in range(ts):                      # fully unrolled local time loop
        gates = (xw[t * bt:(t + 1) * bt, :]
                 + jnp.dot(h, whh, preferred_element_type=jnp.float32)
                 + bias)                     # (bt, 4H)

        # One EUP pass over the fused (bt, 4H) tile:
        #   sigmoid(x) = 0.5*(tanh(x/2)+1);  g-gate keeps plain tanh.
        th = jnp.tanh(gates * scale)
        act = jnp.where(is_g, th, 0.5 * (th + 1.0))
        i_g = act[:, 0 * H:1 * H]
        f_g = act[:, 1 * H:2 * H]
        g_g = act[:, 2 * H:3 * H]
        o_g = act[:, 3 * H:4 * H]

        c_new = f_g * c + i_g * g_g
        h_new = o_g * jnp.tanh(c_new)

        # pack/pad_packed semantics: state frozen at t >= length[b]
        valid = (c_idx * ts + t) < lens                    # (bt, 1) bool
        h = jnp.where(valid, h_new, h)
        c = jnp.where(valid, c_new, c)
        h_outs.append(jnp.where(valid, h_new, 0.0))        # padded slots feed zeros to fc

    # Chunk-level fc + sigmoid: one matmul against the block-diagonal fc weight,
    # flushed as a single lane-dense (bt, ts*O) store per chunk.
    hcat = jnp.concatenate(h_outs, axis=-1)                # (bt, ts*H)
    y = jnp.dot(hcat, wfcb_ref[...], preferred_element_type=jnp.float32) + bfcb_ref[...]
    out_ref[0] = 0.5 * (jnp.tanh(0.5 * y) + 1.0)           # sigmoid via tanh

    # carry state to next chunk
    h_sc[...] = h
    c_sc[...] = c

    @pl.when(c_idx == pl.num_programs(1) - 1)
    def _final():
        hn_ref[0] = h
        cn_ref[0] = c


def bow_lstm_forward(x, lengths, params, *, ts=None, bt=None):
    """x: (B, S, D_in) float32, lengths: (B,) int. Returns (X, (h_n, c_n))."""
    B, S, D = x.shape
    w_ih, w_hh, b_ih, b_hh, w_fc, b_fc = (params[k] for k in
                                          ("w_ih", "w_hh", "b_ih", "b_hh", "w_fc", "b_fc"))
    H = w_hh.shape[1]
    O = w_fc.shape[0]

    # --- tiling choices -------------------------------------------------------
    if ts is None:
        ts = S if S <= 32 else 32                 # timesteps per grid step
    S_pad = pl.cdiv(S, ts) * ts
    B_pad = pl.cdiv(B, 8) * 8                     # sublane-aligned batch
    if bt is None:
        bt = B_pad                                # split (multiple of 8) for v7x 2-TC
    n_chunks = S_pad // ts
    n_btiles = B_pad // bt

    # --- layout glue ----------------------------------------------------------
    x_tm = jnp.transpose(x.astype(jnp.float32), (1, 0, 2))            # (S, B, D)
    x_tm = jnp.pad(x_tm, ((0, S_pad - S), (0, B_pad - B), (0, 0)))
    len_col = jnp.pad(lengths.astype(jnp.int32), (0, B_pad - B)).reshape(B_pad, 1)
    wih_t = jnp.transpose(w_ih)                                       # (D, 4H)
    whh_t = jnp.transpose(w_hh)                                       # (H, 4H)
    b_all = (b_ih + b_hh).reshape(1, 4 * H)                           # (1, 4H)
    # block-diagonal fc weight: one lane-dense matmul handles all ts timesteps
    wfc_blk = jax.scipy.linalg.block_diag(*([jnp.transpose(w_fc)] * ts))   # (ts*H, ts*O)
    bfc_tiled = jnp.tile(b_fc, ts).reshape(1, ts * O)                      # (1, ts*O)

    kernel = functools.partial(_bow_lstm_kernel, hidden_dim=H, ts=ts)

    out, h_n, c_n = pl.pallas_call(
        kernel,
        out_shape=(
            jax.ShapeDtypeStruct((n_chunks, B_pad, ts * O), jnp.float32),
            jax.ShapeDtypeStruct((1, B_pad, H), jnp.float32),
            jax.ShapeDtypeStruct((1, B_pad, H), jnp.float32),
        ),
        grid_spec=pltpu.PrefetchScalarGridSpec(
            num_scalar_prefetch=0,
            grid=(n_btiles, n_chunks),
            in_specs=[
                pl.BlockSpec((ts, bt, D), lambda b, c: (c, b, 0)),        # x chunk
                pl.BlockSpec((bt, 1), lambda b, c: (b, 0)),               # lengths
                pl.BlockSpec((D, 4 * H), lambda b, c: (0, 0)),            # W_ih^T
                pl.BlockSpec((H, 4 * H), lambda b, c: (0, 0)),            # W_hh^T
                pl.BlockSpec((1, 4 * H), lambda b, c: (0, 0)),            # b_ih + b_hh
                pl.BlockSpec((ts * H, ts * O), lambda b, c: (0, 0)),      # block-diag W_fc^T
                pl.BlockSpec((1, ts * O), lambda b, c: (0, 0)),           # tiled b_fc
            ],
            out_specs=[
                pl.BlockSpec((1, bt, ts * O), lambda b, c: (c, b, 0)),    # per-chunk output
                pl.BlockSpec((1, bt, H), lambda b, c: (0, b, 0)),         # h_n (resident)
                pl.BlockSpec((1, bt, H), lambda b, c: (0, b, 0)),         # c_n (resident)
            ],
            scratch_shapes=[
                pltpu.VMEM((bt, H), jnp.float32),                         # h state
                pltpu.VMEM((bt, H), jnp.float32),                         # c state
            ],
        ),
        compiler_params=pltpu.CompilerParams(
            dimension_semantics=("parallel", "arbitrary")),
    )(x_tm, len_col, wih_t, whh_t, b_all, wfc_blk, bfc_tiled)

    # (C, B_pad, ts*O) -> (B, S, O) -> (B, S*O)   (matches X.view(batch, -1))
    out = out.reshape(n_chunks, B_pad, ts, O)
    out = jnp.transpose(out, (1, 0, 2, 3)).reshape(B_pad, S_pad, O)
    X = out[:B, :S].reshape(B, S * O)
    h_n = h_n[:, :B, :]
    c_n = c_n[:, :B, :]
    return X, (h_n, c_n)


def _reference_forward(x, lengths, params):
    """Pure-JAX masked LSTM reference (lax.scan) for correctness checking."""
    B, S, D = x.shape
    w_ih, w_hh, b_ih, b_hh, w_fc, b_fc = (params[k] for k in
                                          ("w_ih", "w_hh", "b_ih", "b_hh", "w_fc", "b_fc"))
    H = w_hh.shape[1]

    def step(carry, inp):
        h, c = carry
        x_t, t = inp
        gates = x_t @ w_ih.T + h @ w_hh.T + b_ih + b_hh
        i_g = jax.nn.sigmoid(gates[:, 0 * H:1 * H])
        f_g = jax.nn.sigmoid(gates[:, 1 * H:2 * H])
        g_g = jnp.tanh(gates[:, 2 * H:3 * H])
        o_g = jax.nn.sigmoid(gates[:, 3 * H:4 * H])
        c_new = f_g * c + i_g * g_g
        h_new = o_g * jnp.tanh(c_new)
        valid = (t < lengths)[:, None]
        h_upd = jnp.where(valid, h_new, h)
        c_upd = jnp.where(valid, c_new, c)
        y = jax.nn.sigmoid(jnp.where(valid, h_new, 0.0) @ w_fc.T + b_fc)
        return (h_upd, c_upd), y

    init = (jnp.zeros((B, H), jnp.float32), jnp.zeros((B, H), jnp.float32))
    (h_n, c_n), ys = jax.lax.scan(step, init,
                                  (jnp.transpose(x, (1, 0, 2)), jnp.arange(S)))
    X = jnp.transpose(ys, (1, 0, 2)).reshape(B, -1)
    return X, (h_n[None], c_n[None])


def init_params(key, input_dim, hidden_dim, output_dim):
    ks = jax.random.split(key, 6)
    s = 1.0 / jnp.sqrt(hidden_dim)
    return {
        "w_ih": jax.random.uniform(ks[0], (4 * hidden_dim, input_dim), jnp.float32, -s, s),
        "w_hh": jax.random.uniform(ks[1], (4 * hidden_dim, hidden_dim), jnp.float32, -s, s),
        "b_ih": jax.random.uniform(ks[2], (4 * hidden_dim,), jnp.float32, -s, s),
        "b_hh": jax.random.uniform(ks[3], (4 * hidden_dim,), jnp.float32, -s, s),
        "w_fc": jax.random.uniform(ks[4], (output_dim, hidden_dim), jnp.float32, -s, s),
        "b_fc": jax.random.uniform(ks[5], (output_dim,), jnp.float32, -s, s),
    }


if __name__ == "__main__":
    B, S, D_IN, HID, OUT = 8, 8, 16, 32, 1

    key = jax.random.PRNGKey(0)
    k_x, k_p = jax.random.split(key)
    x = jax.random.normal(k_x, (B, S, D_IN), jnp.float32)
    lengths = jnp.array([8, 7, 6, 5, 4, 3, 2, 1], dtype=jnp.int32)   # posts per thread
    params = init_params(k_p, D_IN, HID, OUT)

    X, (h_n, c_n) = bow_lstm_forward(x, lengths, params)
    jax.block_until_ready((X, h_n, c_n))

    X_ref, (h_ref, c_ref) = _reference_forward(x, lengths, params)
    assert X.shape == (B, S * OUT)
    assert h_n.shape == (1, B, HID) and c_n.shape == (1, B, HID)
    assert jnp.allclose(X, X_ref, rtol=1e-4, atol=1e-4)
    assert jnp.allclose(h_n, h_ref, rtol=1e-4, atol=1e-4)
    assert jnp.allclose(c_n, c_ref, rtol=1e-4, atol=1e-4)

    print("KERNEL_OK")
</pallas_src>

<mosaic_0001>
module attributes {stable_mosaic.version = 11 : i64} {
  func.func @_bow_lstm_kernel(%arg0: i32, %arg1: i32, %arg2: memref<8x8x16xf32, #tpu.memory_space<vmem>>, %arg3: memref<8x1xi32, #tpu.memory_space<vmem>>, %arg4: memref<16x128xf32, #tpu.memory_space<vmem>>, %arg5: memref<32x128xf32, #tpu.memory_space<vmem>>, %arg6: memref<1x128xf32, #tpu.memory_space<vmem>>, %arg7: memref<256x8xf32, #tpu.memory_space<vmem>>, %arg8: memref<1x8xf32, #tpu.memory_space<vmem>>, %arg9: memref<1x8x8xf32, #tpu.memory_space<vmem>>, %arg10: memref<1x8x32xf32, #tpu.memory_space<vmem>>, %arg11: memref<1x8x32xf32, #tpu.memory_space<vmem>>, %arg12: memref<8x32xf32, #tpu.memory_space<vmem>>, %arg13: memref<8x32xf32, #tpu.memory_space<vmem>>) attributes {dimension_semantics = [#tpu.dimension_semantics<parallel>, #tpu.dimension_semantics<arbitrary>], iteration_bounds = array<i64: 1, 1>, scalar_prefetch = 0 : i64, scratch_operands = 2 : i64, tpu.core_type = #tpu.core_type<tc>, window_params = [{transform_indices = @transform_0, window_bounds = array<i64: 8, 8, 16>}, {transform_indices = @transform_1, window_bounds = array<i64: 8, 1>}, {pipeline_mode = #tpu.pipeline_mode<synchronous>, transform_indices = @transform_2, window_bounds = array<i64: 16, 128>}, {pipeline_mode = #tpu.pipeline_mode<synchronous>, transform_indices = @transform_3, window_bounds = array<i64: 32, 128>}, {pipeline_mode = #tpu.pipeline_mode<synchronous>, transform_indices = @transform_4, window_bounds = array<i64: 1, 128>}, {pipeline_mode = #tpu.pipeline_mode<synchronous>, transform_indices = @transform_5, window_bounds = array<i64: 256, 8>}, {pipeline_mode = #tpu.pipeline_mode<synchronous>, transform_indices = @transform_6, window_bounds = array<i64: 1, 8>}, {transform_indices = @transform_7, window_bounds = array<i64: 1, 8, 8>}, {transform_indices = @transform_8, window_bounds = array<i64: 1, 8, 32>}, {transform_indices = @transform_9, window_bounds = array<i64: 1, 8, 32>}]} {
    %c0_i32 = arith.constant 0 : i32
    %0 = arith.cmpi eq, %arg1, %c0_i32 : i32
    %1 = arith.extui %0 : i1 to i32
    %c0_i32_0 = arith.constant 0 : i32
    %2 = arith.cmpi ne, %1, %c0_i32_0 : i32
    scf.if %2 {
      %cst_74 = arith.constant 0.000000e+00 : f32
      %322 = vector.broadcast %cst_74 : f32 to vector<8x32xf32>
      %c0_75 = arith.constant 0 : index
      %c0_76 = arith.constant 0 : index
      %323 = vector.load %arg12[%c0_75, %c0_76] : memref<8x32xf32, #tpu.memory_space<vmem>>, vector<8x32xf32>
      tpu.vector_store %arg12[%c0_75, %c0_76], %322 {strides = array<i32>} : memref<8x32xf32, #tpu.memory_space<vmem>>, vector<8x32xf32>,
      %cst_77 = arith.constant 0.000000e+00 : f32
      %324 = vector.broadcast %cst_77 : f32 to vector<8x32xf32>
      %c0_78 = arith.constant 0 : index
      %c0_79 = arith.constant 0 : index
      %325 = vector.load %arg13[%c0_78, %c0_79] : memref<8x32xf32, #tpu.memory_space<vmem>>, vector<8x32xf32>
      tpu.vector_store %arg13[%c0_78, %c0_79], %324 {strides = array<i32>} : memref<8x32xf32, #tpu.memory_space<vmem>>, vector<8x32xf32>,
    } else {
    }
    %c0 = arith.constant 0 : index
    %c0_1 = arith.constant 0 : index
    %c0_2 = arith.constant 0 : index
    %3 = vector.load %arg2[%c0, %c0_1, %c0_2] : memref<8x8x16xf32, #tpu.memory_space<vmem>>, vector<8x8x16xf32>
    %4 = vector.shape_cast %3 : vector<8x8x16xf32> to vector<64x16xf32>
    %c0_3 = arith.constant 0 : index
    %c0_4 = arith.constant 0 : index
    %5 = vector.load %arg4[%c0_3, %c0_4] : memref<16x128xf32, #tpu.memory_space<vmem>>, vector<16x128xf32>
    %cst = arith.constant dense<0.000000e+00> : vector<64x128xf32>
    %6 = tpu.matmul %4, %5, %cst {dimension_numbers = #tpu.dot_dimension_numbers<[1], [0], [0], [1], [0, 0, 1, 1], [], []>} : vector<64x16xf32>, vector<16x128xf32>, vector<64x128xf32> -> vector<64x128xf32>
    %c0_5 = arith.constant 0 : index
    %c0_6 = arith.constant 0 : index
    %7 = vector.load %arg5[%c0_5, %c0_6] : memref<32x128xf32, #tpu.memory_space<vmem>>, vector<32x128xf32>
    %c0_7 = arith.constant 0 : index
    %c0_8 = arith.constant 0 : index
    %8 = vector.load %arg6[%c0_7, %c0_8] : memref<1x128xf32, #tpu.memory_space<vmem>>, vector<1x128xf32>
    %c0_9 = arith.constant 0 : index
    %c0_10 = arith.constant 0 : index
    %9 = vector.load %arg3[%c0_9, %c0_10] : memref<8x1xi32, #tpu.memory_space<vmem>>, vector<8x1xi32>
    %10 = tpu.iota {dimensions = array<i32: 1>} : vector<8x128xi32>
    %c64_i32 = arith.constant 64 : i32
    %11 = vector.broadcast %c64_i32 : i32 to vector<8x128xi32>
    %12 = arith.cmpi sge, %10, %11 : vector<8x128xi32>
    %c96_i32 = arith.constant 96 : i32
    %13 = vector.broadcast %c96_i32 : i32 to vector<8x128xi32>
    %14 = arith.cmpi slt, %10, %13 : vector<8x128xi32>
    %15 = arith.andi %12, %14 : vector<8x128xi1>
    %cst_11 = arith.constant 1.000000e+00 : f32
    %cst_12 = arith.constant 5.000000e-01 : f32
    %16 = vector.broadcast %cst_11 : f32 to vector<8x128xf32>
    %17 = vector.broadcast %cst_12 : f32 to vector<8x128xf32>
    %18 = arith.select %15, %16, %17 : vector<8x128xi1>, vector<8x128xf32>
    %c0_13 = arith.constant 0 : index
    %c0_14 = arith.constant 0 : index
    %19 = vector.load %arg12[%c0_13, %c0_14] : memref<8x32xf32, #tpu.memory_space<vmem>>, vector<8x32xf32>
    %c0_15 = arith.constant 0 : index
    %c0_16 = arith.constant 0 : index
    %20 = vector.load %arg13[%c0_15, %c0_16] : memref<8x32xf32, #tpu.memory_space<vmem>>, vector<8x32xf32>
    %21 = vector.extract_strided_slice %6 {offsets = [0, 0], sizes = [8, 128], strides = [1, 1]} : vector<64x128xf32> to vector<8x128xf32>
    %cst_17 = arith.constant dense<0.000000e+00> : vector<8x128xf32>
    %22 = tpu.matmul %19, %7, %cst_17 {dimension_numbers = #tpu.dot_dimension_numbers<[1], [0], [0], [1], [0, 0, 1, 1], [], []>} : vector<8x32xf32>, vector<32x128xf32>, vector<8x128xf32> -> vector<8x128xf32>
    %23 = arith.addf %21, %22 : vector<8x128xf32>
    %24 = vector.broadcast %8 : vector<1x128xf32> to vector<8x128xf32>
    %25 = arith.addf %23, %24 : vector<8x128xf32>
    %26 = arith.mulf %25, %18 : vector<8x128xf32>
    %27 = math.tanh %26 : vector<8x128xf32>
    %cst_18 = arith.constant 1.000000e+00 : f32
    %28 = vector.broadcast %cst_18 : f32 to vector<8x128xf32>
    %29 = arith.addf %27, %28 : vector<8x128xf32>
    %cst_19 = arith.constant 5.000000e-01 : f32
    %30 = vector.broadcast %cst_19 : f32 to vector<8x128xf32>
    %31 = arith.mulf %30, %29 : vector<8x128xf32>
    %32 = arith.select %15, %27, %31 : vector<8x128xi1>, vector<8x128xf32>
    %33 = vector.extract_strided_slice %32 {offsets = [0, 0], sizes = [8, 32], strides = [1, 1]} : vector<8x128xf32> to vector<8x32xf32>
    %34 = vector.extract_strided_slice %32 {offsets = [0, 32], sizes = [8, 32], strides = [1, 1]} : vector<8x128xf32> to vector<8x32xf32>
    %35 = vector.extract_strided_slice %32 {offsets = [0, 64], sizes = [8, 32], strides = [1, 1]} : vector<8x128xf32> to vector<8x32xf32>
    %36 = vector.extract_strided_slice %32 {offsets = [0, 96], sizes = [8, 32], strides = [1, 1]} : vector<8x128xf32> to vector<8x32xf32>
    %37 = arith.mulf %34, %20 : vector<8x32xf32>
    %38 = arith.mulf %33, %35 : vector<8x32xf32>
    %39 = arith.addf %37, %38 : vector<8x32xf32>
    %40 = math.tanh %39 : vector<8x32xf32>
    %41 = arith.mulf %36, %40 : vector<8x32xf32>
    %c8_i32 = arith.constant 8 : i32
    %42 = arith.muli %arg1, %c8_i32 : i32
    %c0_i32_20 = arith.constant 0 : i32
    %43 = arith.addi %42, %c0_i32_20 : i32
    %44 = vector.broadcast %43 : i32 to vector<8x1xi32>
    %45 = arith.cmpi slt, %44, %9 : vector<8x1xi32>
    %46 = vector.shape_cast %45 : vector<8x1xi1> to vector<8x1xi1>
    %47 = vector.broadcast %46 : vector<8x1xi1> to vector<8x32xi1>
    %48 = arith.select %47, %41, %19 : vector<8x32xi1>, vector<8x32xf32>
    %49 = vector.shape_cast %45 : vector<8x1xi1> to vector<8x1xi1>
    %50 = vector.broadcast %49 : vector<8x1xi1> to vector<8x32xi1>
    %51 = arith.select %50, %39, %20 : vector<8x32xi1>, vector<8x32xf32>
    %cst_21 = arith.constant 0.000000e+00 : f32
    %52 = vector.shape_cast %45 : vector<8x1xi1> to vector<8x1xi1>
    %53 = vector.broadcast %52 : vector<8x1xi1> to vector<8x32xi1>
    %54 = vector.broadcast %cst_21 : f32 to vector<8x32xf32>
    %55 = arith.select %53, %41, %54 : vector<8x32xi1>, vector<8x32xf32>
    %56 = vector.extract_strided_slice %6 {offsets = [8, 0], sizes = [8, 128], strides = [1, 1]} : vector<64x128xf32> to vector<8x128xf32>
    %cst_22 = arith.constant dense<0.000000e+00> : vector<8x128xf32>
    %57 = tpu.matmul %48, %7, %cst_22 {dimension_numbers = #tpu.dot_dimension_numbers<[1], [0], [0], [1], [0, 0, 1, 1], [], []>} : vector<8x32xf32>, vector<32x128xf32>, vector<8x128xf32> -> vector<8x128xf32>
    %58 = arith.addf %56, %57 : vector<8x128xf32>
    %59 = vector.broadcast %8 : vector<1x128xf32> to vector<8x128xf32>
    %60 = arith.addf %58, %59 : vector<8x128xf32>
    %61 = arith.mulf %60, %18 : vector<8x128xf32>
    %62 = math.tanh %61 : vector<8x128xf32>
    %cst_23 = arith.constant 1.000000e+00 : f32
    %63 = vector.broadcast %cst_23 : f32 to vector<8x128xf32>
    %64 = arith.addf %62, %63 : vector<8x128xf32>
    %cst_24 = arith.constant 5.000000e-01 : f32
    %65 = vector.broadcast %cst_24 : f32 to vector<8x128xf32>
    %66 = arith.mulf %65, %64 : vector<8x128xf32>
    %67 = arith.select %15, %62, %66 : vector<8x128xi1>, vector<8x128xf32>
    %68 = vector.extract_strided_slice %67 {offsets = [0, 0], sizes = [8, 32], strides = [1, 1]} : vector<8x128xf32> to vector<8x32xf32>
    %69 = vector.extract_strided_slice %67 {offsets = [0, 32], sizes = [8, 32], strides = [1, 1]} : vector<8x128xf32> to vector<8x32xf32>
    %70 = vector.extract_strided_slice %67 {offsets = [0, 64], sizes = [8, 32], strides = [1, 1]} : vector<8x128xf32> to vector<8x32xf32>
    %71 = vector.extract_strided_slice %67 {offsets = [0, 96], sizes = [8, 32], strides = [1, 1]} : vector<8x128xf32> to vector<8x32xf32>
    %72 = arith.mulf %69, %51 : vector<8x32xf32>
    %73 = arith.mulf %68, %70 : vector<8x32xf32>
    %74 = arith.addf %72, %73 : vector<8x32xf32>
    %75 = math.tanh %74 : vector<8x32xf32>
    %76 = arith.mulf %71, %75 : vector<8x32xf32>
    %c8_i32_25 = arith.constant 8 : i32
    %77 = arith.muli %arg1, %c8_i32_25 : i32
    %c1_i32 = arith.constant 1 : i32
    %78 = arith.addi %77, %c1_i32 : i32
    %79 = vector.broadcast %78 : i32 to vector<8x1xi32>
    %80 = arith.cmpi slt, %79, %9 : vector<8x1xi32>
    %81 = vector.shape_cast %80 : vector<8x1xi1> to vector<8x1xi1>
    %82 = vector.broadcast %81 : vector<8x1xi1> to vector<8x32xi1>
    %83 = arith.select %82, %76, %48 : vector<8x32xi1>, vector<8x32xf32>
    %84 = vector.shape_cast %80 : vector<8x1xi1> to vector<8x1xi1>
    %85 = vector.broadcast %84 : vector<8x1xi1> to vector<8x32xi1>
    %86 = arith.select %85, %74, %51 : vector<8x32xi1>, vector<8x32xf32>
    %cst_26 = arith.constant 0.000000e+00 : f32
    %87 = vector.shape_cast %80 : vector<8x1xi1> to vector<8x1xi1>
    %88 = vector.broadcast %87 : vector<8x1xi1> to vector<8x32xi1>
    %89 = vector.broadcast %cst_26 : f32 to vector<8x32xf32>
    %90 = arith.select %88, %76, %89 : vector<8x32xi1>, vector<8x32xf32>
    %91 = vector.extract_strided_slice %6 {offsets = [16, 0], sizes = [8, 128], strides = [1, 1]} : vector<64x128xf32> to vector<8x128xf32>
    %cst_27 = arith.constant dense<0.000000e+00> : vector<8x128xf32>
    %92 = tpu.matmul %83, %7, %cst_27 {dimension_numbers = #tpu.dot_dimension_numbers<[1], [0], [0], [1], [0, 0, 1, 1], [], []>} : vector<8x32xf32>, vector<32x128xf32>, vector<8x128xf32> -> vector<8x128xf32>
    %93 = arith.addf %91, %92 : vector<8x128xf32>
    %94 = vector.broadcast %8 : vector<1x128xf32> to vector<8x128xf32>
    %95 = arith.addf %93, %94 : vector<8x128xf32>
    %96 = arith.mulf %95, %18 : vector<8x128xf32>
    %97 = math.tanh %96 : vector<8x128xf32>
    %cst_28 = arith.constant 1.000000e+00 : f32
    %98 = vector.broadcast %cst_28 : f32 to vector<8x128xf32>
    %99 = arith.addf %97, %98 : vector<8x128xf32>
    %cst_29 = arith.constant 5.000000e-01 : f32
    %100 = vector.broadcast %cst_29 : f32 to vector<8x128xf32>
    %101 = arith.mulf %100, %99 : vector<8x128xf32>
    %102 = arith.select %15, %97, %101 : vector<8x128xi1>, vector<8x128xf32>
    %103 = vector.extract_strided_slice %102 {offsets = [0, 0], sizes = [8, 32], strides = [1, 1]} : vector<8x128xf32> to vector<8x32xf32>
    %104 = vector.extract_strided_slice %102 {offsets = [0, 32], sizes = [8, 32], strides = [1, 1]} : vector<8x128xf32> to vector<8x32xf32>
    %105 = vector.extract_strided_slice %102 {offsets = [0, 64], sizes = [8, 32], strides = [1, 1]} : vector<8x128xf32> to vector<8x32xf32>
    %106 = vector.extract_strided_slice %102 {offsets = [0, 96], sizes = [8, 32], strides = [1, 1]} : vector<8x128xf32> to vector<8x32xf32>
    %107 = arith.mulf %104, %86 : vector<8x32xf32>
    %108 = arith.mulf %103, %105 : vector<8x32xf32>
    %109 = arith.addf %107, %108 : vector<8x32xf32>
    %110 = math.tanh %109 : vector<8x32xf32>
    %111 = arith.mulf %106, %110 : vector<8x32xf32>
    %c8_i32_30 = arith.constant 8 : i32
    %112 = arith.muli %arg1, %c8_i32_30 : i32
    %c2_i32 = arith.constant 2 : i32
    %113 = arith.addi %112, %c2_i32 : i32
    %114 = vector.broadcast %113 : i32 to vector<8x1xi32>
    %115 = arith.cmpi slt, %114, %9 : vector<8x1xi32>
    %116 = vector.shape_cast %115 : vector<8x1xi1> to vector<8x1xi1>
    %117 = vector.broadcast %116 : vector<8x1xi1> to vector<8x32xi1>
    %118 = arith.select %117, %111, %83 : vector<8x32xi1>, vector<8x32xf32>
    %119 = vector.shape_cast %115 : vector<8x1xi1> to vector<8x1xi1>
    %120 = vector.broadcast %119 : vector<8x1xi1> to vector<8x32xi1>
    %121 = arith.select %120, %109, %86 : vector<8x32xi1>, vector<8x32xf32>
    %cst_31 = arith.constant 0.000000e+00 : f32
    %122 = vector.shape_cast %115 : vector<8x1xi1> to vector<8x1xi1>
    %123 = vector.broadcast %122 : vector<8x1xi1> to vector<8x32xi1>
    %124 = vector.broadcast %cst_31 : f32 to vector<8x32xf32>
    %125 = arith.select %123, %111, %124 : vector<8x32xi1>, vector<8x32xf32>
    %126 = vector.extract_strided_slice %6 {offsets = [24, 0], sizes = [8, 128], strides = [1, 1]} : vector<64x128xf32> to vector<8x128xf32>
    %cst_32 = arith.constant dense<0.000000e+00> : vector<8x128xf32>
    %127 = tpu.matmul %118, %7, %cst_32 {dimension_numbers = #tpu.dot_dimension_numbers<[1], [0], [0], [1], [0, 0, 1, 1], [], []>} : vector<8x32xf32>, vector<32x128xf32>, vector<8x128xf32> -> vector<8x128xf32>
    %128 = arith.addf %126, %127 : vector<8x128xf32>
    %129 = vector.broadcast %8 : vector<1x128xf32> to vector<8x128xf32>
    %130 = arith.addf %128, %129 : vector<8x128xf32>
    %131 = arith.mulf %130, %18 : vector<8x128xf32>
    %132 = math.tanh %131 : vector<8x128xf32>
    %cst_33 = arith.constant 1.000000e+00 : f32
    %133 = vector.broadcast %cst_33 : f32 to vector<8x128xf32>
    %134 = arith.addf %132, %133 : vector<8x128xf32>
    %cst_34 = arith.constant 5.000000e-01 : f32
    %135 = vector.broadcast %cst_34 : f32 to vector<8x128xf32>
    %136 = arith.mulf %135, %134 : vector<8x128xf32>
    %137 = arith.select %15, %132, %136 : vector<8x128xi1>, vector<8x128xf32>
    %138 = vector.extract_strided_slice %137 {offsets = [0, 0], sizes = [8, 32], strides = [1, 1]} : vector<8x128xf32> to vector<8x32xf32>
    %139 = vector.extract_strided_slice %137 {offsets = [0, 32], sizes = [8, 32], strides = [1, 1]} : vector<8x128xf32> to vector<8x32xf32>
    %140 = vector.extract_strided_slice %137 {offsets = [0, 64], sizes = [8, 32], strides = [1, 1]} : vector<8x128xf32> to vector<8x32xf32>
    %141 = vector.extract_strided_slice %137 {offsets = [0, 96], sizes = [8, 32], strides = [1, 1]} : vector<8x128xf32> to vector<8x32xf32>
    %142 = arith.mulf %139, %121 : vector<8x32xf32>
    %143 = arith.mulf %138, %140 : vector<8x32xf32>
    %144 = arith.addf %142, %143 : vector<8x32xf32>
    %145 = math.tanh %144 : vector<8x32xf32>
    %146 = arith.mulf %141, %145 : vector<8x32xf32>
    %c8_i32_35 = arith.constant 8 : i32
    %147 = arith.muli %arg1, %c8_i32_35 : i32
    %c3_i32 = arith.constant 3 : i32
    %148 = arith.addi %147, %c3_i32 : i32
    %149 = vector.broadcast %148 : i32 to vector<8x1xi32>
    %150 = arith.cmpi slt, %149, %9 : vector<8x1xi32>
    %151 = vector.shape_cast %150 : vector<8x1xi1> to vector<8x1xi1>
    %152 = vector.broadcast %151 : vector<8x1xi1> to vector<8x32xi1>
    %153 = arith.select %152, %146, %118 : vector<8x32xi1>, vector<8x32xf32>
    %154 = vector.shape_cast %150 : vector<8x1xi1> to vector<8x1xi1>
    %155 = vector.broadcast %154 : vector<8x1xi1> to vector<8x32xi1>
    %156 = arith.select %155, %144, %121 : vector<8x32xi1>, vector<8x32xf32>
    %cst_36 = arith.constant 0.000000e+00 : f32
    %157 = vector.shape_cast %150 : vector<8x1xi1> to vector<8x1xi1>
    %158 = vector.broadcast %157 : vector<8x1xi1> to vector<8x32xi1>
    %159 = vector.broadcast %cst_36 : f32 to vector<8x32xf32>
    %160 = arith.select %158, %146, %159 : vector<8x32xi1>, vector<8x32xf32>
    %161 = vector.extract_strided_slice %6 {offsets = [32, 0], sizes = [8, 128], strides = [1, 1]} : vector<64x128xf32> to vector<8x128xf32>
    %cst_37 = arith.constant dense<0.000000e+00> : vector<8x128xf32>
    %162 = tpu.matmul %153, %7, %cst_37 {dimension_numbers = #tpu.dot_dimension_numbers<[1], [0], [0], [1], [0, 0, 1, 1], [], []>} : vector<8x32xf32>, vector<32x128xf32>, vector<8x128xf32> -> vector<8x128xf32>
    %163 = arith.addf %161, %162 : vector<8x128xf32>
    %164 = vector.broadcast %8 : vector<1x128xf32> to vector<8x128xf32>
    %165 = arith.addf %163, %164 : vector<8x128xf32>
    %166 = arith.mulf %165, %18 : vector<8x128xf32>
    %167 = math.tanh %166 : vector<8x128xf32>
    %cst_38 = arith.constant 1.000000e+00 : f32
    %168 = vector.broadcast %cst_38 : f32 to vector<8x128xf32>
    %169 = arith.addf %167, %168 : vector<8x128xf32>
    %cst_39 = arith.constant 5.000000e-01 : f32
    %170 = vector.broadcast %cst_39 : f32 to vector<8x128xf32>
    %171 = arith.mulf %170, %169 : vector<8x128xf32>
    %172 = arith.select %15, %167, %171 : vector<8x128xi1>, vector<8x128xf32>
    %173 = vector.extract_strided_slice %172 {offsets = [0, 0], sizes = [8, 32], strides = [1, 1]} : vector<8x128xf32> to vector<8x32xf32>
    %174 = vector.extract_strided_slice %172 {offsets = [0, 32], sizes = [8, 32], strides = [1, 1]} : vector<8x128xf32> to vector<8x32xf32>
    %175 = vector.extract_strided_slice %172 {offsets = [0, 64], sizes = [8, 32], strides = [1, 1]} : vector<8x128xf32> to vector<8x32xf32>
    %176 = vector.extract_strided_slice %172 {offsets = [0, 96], sizes = [8, 32], strides = [1, 1]} : vector<8x128xf32> to vector<8x32xf32>
    %177 = arith.mulf %174, %156 : vector<8x32xf32>
    %178 = arith.mulf %173, %175 : vector<8x32xf32>
    %179 = arith.addf %177, %178 : vector<8x32xf32>
    %180 = math.tanh %179 : vector<8x32xf32>
    %181 = arith.mulf %176, %180 : vector<8x32xf32>
    %c8_i32_40 = arith.constant 8 : i32
    %182 = arith.muli %arg1, %c8_i32_40 : i32
    %c4_i32 = arith.constant 4 : i32
    %183 = arith.addi %182, %c4_i32 : i32
    %184 = vector.broadcast %183 : i32 to vector<8x1xi32>
    %185 = arith.cmpi slt, %184, %9 : vector<8x1xi32>
    %186 = vector.shape_cast %185 : vector<8x1xi1> to vector<8x1xi1>
    %187 = vector.broadcast %186 : vector<8x1xi1> to vector<8x32xi1>
    %188 = arith.select %187, %181, %153 : vector<8x32xi1>, vector<8x32xf32>
    %189 = vector.shape_cast %185 : vector<8x1xi1> to vector<8x1xi1>
    %190 = vector.broadcast %189 : vector<8x1xi1> to vector<8x32xi1>
    %191 = arith.select %190, %179, %156 : vector<8x32xi1>, vector<8x32xf32>
    %cst_41 = arith.constant 0.000000e+00 : f32
    %192 = vector.shape_cast %185 : vector<8x1xi1> to vector<8x1xi1>
    %193 = vector.broadcast %192 : vector<8x1xi1> to vector<8x32xi1>
    %194 = vector.broadcast %cst_41 : f32 to vector<8x32xf32>
    %195 = arith.select %193, %181, %194 : vector<8x32xi1>, vector<8x32xf32>
    %196 = vector.extract_strided_slice %6 {offsets = [40, 0], sizes = [8, 128], strides = [1, 1]} : vector<64x128xf32> to vector<8x128xf32>
    %cst_42 = arith.constant dense<0.000000e+00> : vector<8x128xf32>
    %197 = tpu.matmul %188, %7, %cst_42 {dimension_numbers = #tpu.dot_dimension_numbers<[1], [0], [0], [1], [0, 0, 1, 1], [], []>} : vector<8x32xf32>, vector<32x128xf32>, vector<8x128xf32> -> vector<8x128xf32>
    %198 = arith.addf %196, %197 : vector<8x128xf32>
    %199 = vector.broadcast %8 : vector<1x128xf32> to vector<8x128xf32>
    %200 = arith.addf %198, %199 : vector<8x128xf32>
    %201 = arith.mulf %200, %18 : vector<8x128xf32>
    %202 = math.tanh %201 : vector<8x128xf32>
    %cst_43 = arith.constant 1.000000e+00 : f32
    %203 = vector.broadcast %cst_43 : f32 to vector<8x128xf32>
    %204 = arith.addf %202, %203 : vector<8x128xf32>
    %cst_44 = arith.constant 5.000000e-01 : f32
    %205 = vector.broadcast %cst_44 : f32 to vector<8x128xf32>
    %206 = arith.mulf %205, %204 : vector<8x128xf32>
    %207 = arith.select %15, %202, %206 : vector<8x128xi1>, vector<8x128xf32>
    %208 = vector.extract_strided_slice %207 {offsets = [0, 0], sizes = [8, 32], strides = [1, 1]} : vector<8x128xf32> to vector<8x32xf32>
    %209 = vector.extract_strided_slice %207 {offsets = [0, 32], sizes = [8, 32], strides = [1, 1]} : vector<8x128xf32> to vector<8x32xf32>
    %210 = vector.extract_strided_slice %207 {offsets = [0, 64], sizes = [8, 32], strides = [1, 1]} : vector<8x128xf32> to vector<8x32xf32>
    %211 = vector.extract_strided_slice %207 {offsets = [0, 96], sizes = [8, 32], strides = [1, 1]} : vector<8x128xf32> to vector<8x32xf32>
    %212 = arith.mulf %209, %191 : vector<8x32xf32>
    %213 = arith.mulf %208, %210 : vector<8x32xf32>
    %214 = arith.addf %212, %213 : vector<8x32xf32>
    %215 = math.tanh %214 : vector<8x32xf32>
    %216 = arith.mulf %211, %215 : vector<8x32xf32>
    %c8_i32_45 = arith.constant 8 : i32
    %217 = arith.muli %arg1, %c8_i32_45 : i32
    %c5_i32 = arith.constant 5 : i32
    %218 = arith.addi %217, %c5_i32 : i32
    %219 = vector.broadcast %218 : i32 to vector<8x1xi32>
    %220 = arith.cmpi slt, %219, %9 : vector<8x1xi32>
    %221 = vector.shape_cast %220 : vector<8x1xi1> to vector<8x1xi1>
    %222 = vector.broadcast %221 : vector<8x1xi1> to vector<8x32xi1>
    %223 = arith.select %222, %216, %188 : vector<8x32xi1>, vector<8x32xf32>
    %224 = vector.shape_cast %220 : vector<8x1xi1> to vector<8x1xi1>
    %225 = vector.broadcast %224 : vector<8x1xi1> to vector<8x32xi1>
    %226 = arith.select %225, %214, %191 : vector<8x32xi1>, vector<8x32xf32>
    %cst_46 = arith.constant 0.000000e+00 : f32
    %227 = vector.shape_cast %220 : vector<8x1xi1> to vector<8x1xi1>
    %228 = vector.broadcast %227 : vector<8x1xi1> to vector<8x32xi1>
    %229 = vector.broadcast %cst_46 : f32 to vector<8x32xf32>
    %230 = arith.select %228, %216, %229 : vector<8x32xi1>, vector<8x32xf32>
    %231 = vector.extract_strided_slice %6 {offsets = [48, 0], sizes = [8, 128], strides = [1, 1]} : vector<64x128xf32> to vector<8x128xf32>
    %cst_47 = arith.constant dense<0.000000e+00> : vector<8x128xf32>
    %232 = tpu.matmul %223, %7, %cst_47 {dimension_numbers = #tpu.dot_dimension_numbers<[1], [0], [0], [1], [0, 0, 1, 1], [], []>} : vector<8x32xf32>, vector<32x128xf32>, vector<8x128xf32> -> vector<8x128xf32>
    %233 = arith.addf %231, %232 : vector<8x128xf32>
    %234 = vector.broadcast %8 : vector<1x128xf32> to vector<8x128xf32>
    %235 = arith.addf %233, %234 : vector<8x128xf32>
    %236 = arith.mulf %235, %18 : vector<8x128xf32>
    %237 = math.tanh %236 : vector<8x128xf32>
    %cst_48 = arith.constant 1.000000e+00 : f32
    %238 = vector.broadcast %cst_48 : f32 to vector<8x128xf32>
    %239 = arith.addf %237, %238 : vector<8x128xf32>
    %cst_49 = arith.constant 5.000000e-01 : f32
    %240 = vector.broadcast %cst_49 : f32 to vector<8x128xf32>
    %241 = arith.mulf %240, %239 : vector<8x128xf32>
    %242 = arith.select %15, %237, %241 : vector<8x128xi1>, vector<8x128xf32>
    %243 = vector.extract_strided_slice %242 {offsets = [0, 0], sizes = [8, 32], strides = [1, 1]} : vector<8x128xf32> to vector<8x32xf32>
    %244 = vector.extract_strided_slice %242 {offsets = [0, 32], sizes = [8, 32], strides = [1, 1]} : vector<8x128xf32> to vector<8x32xf32>
    %245 = vector.extract_strided_slice %242 {offsets = [0, 64], sizes = [8, 32], strides = [1, 1]} : vector<8x128xf32> to vector<8x32xf32>
    %246 = vector.extract_strided_slice %242 {offsets = [0, 96], sizes = [8, 32], strides = [1, 1]} : vector<8x128xf32> to vector<8x32xf32>
    %247 = arith.mulf %244, %226 : vector<8x32xf32>
    %248 = arith.mulf %243, %245 : vector<8x32xf32>
    %249 = arith.addf %247, %248 : vector<8x32xf32>
    %250 = math.tanh %249 : vector<8x32xf32>
    %251 = arith.mulf %246, %250 : vector<8x32xf32>
    %c8_i32_50 = arith.constant 8 : i32
    %252 = arith.muli %arg1, %c8_i32_50 : i32
    %c6_i32 = arith.constant 6 : i32
    %253 = arith.addi %252, %c6_i32 : i32
    %254 = vector.broadcast %253 : i32 to vector<8x1xi32>
    %255 = arith.cmpi slt, %254, %9 : vector<8x1xi32>
    %256 = vector.shape_cast %255 : vector<8x1xi1> to vector<8x1xi1>
    %257 = vector.broadcast %256 : vector<8x1xi1> to vector<8x32xi1>
    %258 = arith.select %257, %251, %223 : vector<8x32xi1>, vector<8x32xf32>
    %259 = vector.shape_cast %255 : vector<8x1xi1> to vector<8x1xi1>
    %260 = vector.broadcast %259 : vector<8x1xi1> to vector<8x32xi1>
    %261 = arith.select %260, %249, %226 : vector<8x32xi1>, vector<8x32xf32>
    %cst_51 = arith.constant 0.000000e+00 : f32
    %262 = vector.shape_cast %255 : vector<8x1xi1> to vector<8x1xi1>
    %263 = vector.broadcast %262 : vector<8x1xi1> to vector<8x32xi1>
    %264 = vector.broadcast %cst_51 : f32 to vector<8x32xf32>
    %265 = arith.select %263, %251, %264 : vector<8x32xi1>, vector<8x32xf32>
    %266 = vector.extract_strided_slice %6 {offsets = [56, 0], sizes = [8, 128], strides = [1, 1]} : vector<64x128xf32> to vector<8x128xf32>
    %cst_52 = arith.constant dense<0.000000e+00> : vector<8x128xf32>
    %267 = tpu.matmul %258, %7, %cst_52 {dimension_numbers = #tpu.dot_dimension_numbers<[1], [0], [0], [1], [0, 0, 1, 1], [], []>} : vector<8x32xf32>, vector<32x128xf32>, vector<8x128xf32> -> vector<8x128xf32>
    %268 = arith.addf %266, %267 : vector<8x128xf32>
    %269 = vector.broadcast %8 : vector<1x128xf32> to vector<8x128xf32>
    %270 = arith.addf %268, %269 : vector<8x128xf32>
    %271 = arith.mulf %270, %18 : vector<8x128xf32>
    %272 = math.tanh %271 : vector<8x128xf32>
    %cst_53 = arith.constant 1.000000e+00 : f32
    %273 = vector.broadcast %cst_53 : f32 to vector<8x128xf32>
    %274 = arith.addf %272, %273 : vector<8x128xf32>
    %cst_54 = arith.constant 5.000000e-01 : f32
    %275 = vector.broadcast %cst_54 : f32 to vector<8x128xf32>
    %276 = arith.mulf %275, %274 : vector<8x128xf32>
    %277 = arith.select %15, %272, %276 : vector<8x128xi1>, vector<8x128xf32>
    %278 = vector.extract_strided_slice %277 {offsets = [0, 0], sizes = [8, 32], strides = [1, 1]} : vector<8x128xf32> to vector<8x32xf32>
    %279 = vector.extract_strided_slice %277 {offsets = [0, 32], sizes = [8, 32], strides = [1, 1]} : vector<8x128xf32> to vector<8x32xf32>
    %280 = vector.extract_strided_slice %277 {offsets = [0, 64], sizes = [8, 32], strides = [1, 1]} : vector<8x128xf32> to vector<8x32xf32>
    %281 = vector.extract_strided_slice %277 {offsets = [0, 96], sizes = [8, 32], strides = [1, 1]} : vector<8x128xf32> to vector<8x32xf32>
    %282 = arith.mulf %279, %261 : vector<8x32xf32>
    %283 = arith.mulf %278, %280 : vector<8x32xf32>
    %284 = arith.addf %282, %283 : vector<8x32xf32>
    %285 = math.tanh %284 : vector<8x32xf32>
    %286 = arith.mulf %281, %285 : vector<8x32xf32>
    %c8_i32_55 = arith.constant 8 : i32
    %287 = arith.muli %arg1, %c8_i32_55 : i32
    %c7_i32 = arith.constant 7 : i32
    %288 = arith.addi %287, %c7_i32 : i32
    %289 = vector.broadcast %288 : i32 to vector<8x1xi32>
    %290 = arith.cmpi slt, %289, %9 : vector<8x1xi32>
    %291 = vector.shape_cast %290 : vector<8x1xi1> to vector<8x1xi1>
    %292 = vector.broadcast %291 : vector<8x1xi1> to vector<8x32xi1>
    %293 = arith.select %292, %286, %258 : vector<8x32xi1>, vector<8x32xf32>
    %294 = vector.shape_cast %290 : vector<8x1xi1> to vector<8x1xi1>
    %295 = vector.broadcast %294 : vector<8x1xi1> to vector<8x32xi1>
    %296 = arith.select %295, %284, %261 : vector<8x32xi1>, vector<8x32xf32>
    %cst_56 = arith.constant 0.000000e+00 : f32
    %297 = vector.shape_cast %290 : vector<8x1xi1> to vector<8x1xi1>
    %298 = vector.broadcast %297 : vector<8x1xi1> to vector<8x32xi1>
    %299 = vector.broadcast %cst_56 : f32 to vector<8x32xf32>
    %300 = arith.select %298, %286, %299 : vector<8x32xi1>, vector<8x32xf32>
    %301 = tpu.concatenate %55, %90, %125, %160, %195, %230, %265, %300 in 1 : vector<8x32xf32>, vector<8x32xf32>, vector<8x32xf32>, vector<8x32xf32>, vector<8x32xf32>, vector<8x32xf32>, vector<8x32xf32>, vector<8x32xf32> -> vector<8x256xf32>
    %c0_57 = arith.constant 0 : index
    %c0_58 = arith.constant 0 : index
    %302 = vector.load %arg7[%c0_57, %c0_58] : memref<256x8xf32, #tpu.memory_space<vmem>>, vector<256x8xf32>
    %cst_59 = arith.constant dense<0.000000e+00> : vector<8x8xf32>
    %303 = tpu.matmul %301, %302, %cst_59 {dimension_numbers = #tpu.dot_dimension_numbers<[1], [0], [0], [1], [0, 0, 1, 1], [], []>} : vector<8x256xf32>, vector<256x8xf32>, vector<8x8xf32> -> vector<8x8xf32>
    %c0_60 = arith.constant 0 : index
    %c0_61 = arith.constant 0 : index
    %304 = vector.load %arg8[%c0_60, %c0_61] : memref<1x8xf32, #tpu.memory_space<vmem>>, vector<1x8xf32>
    %305 = vector.broadcast %304 : vector<1x8xf32> to vector<8x8xf32>
    %306 = arith.addf %303, %305 : vector<8x8xf32>
    %cst_62 = arith.constant 5.000000e-01 : f32
    %307 = vector.broadcast %cst_62 : f32 to vector<8x8xf32>
    %308 = arith.mulf %307, %306 : vector<8x8xf32>
    %309 = math.tanh %308 : vector<8x8xf32>
    %cst_63 = arith.constant 1.000000e+00 : f32
    %310 = vector.broadcast %cst_63 : f32 to vector<8x8xf32>
    %311 = arith.addf %309, %310 : vector<8x8xf32>
    %cst_64 = arith.constant 5.000000e-01 : f32
    %312 = vector.broadcast %cst_64 : f32 to vector<8x8xf32>
    %313 = arith.mulf %312, %311 : vector<8x8xf32>
    %c0_65 = arith.constant 0 : index
    %c0_66 = arith.constant 0 : index
    %c0_67 = arith.constant 0 : index
    %314 = vector.load %arg9[%c0_65, %c0_66, %c0_67] : memref<1x8x8xf32, #tpu.memory_space<vmem>>, vector<1x8x8xf32>
    %315 = vector.shape_cast %314 : vector<1x8x8xf32> to vector<8x8xf32>
    %316 = vector.shape_cast %313 : vector<8x8xf32> to vector<1x8x8xf32>
    tpu.vector_store %arg9[%c0_65, %c0_66, %c0_67], %316 {strides = array<i32>} : memref<1x8x8xf32, #tpu.memory_space<vmem>>, vector<1x8x8xf32>,
    %c0_68 = arith.constant 0 : index
    %c0_69 = arith.constant 0 : index
    %317 = vector.load %arg12[%c0_68, %c0_69] : memref<8x32xf32, #tpu.memory_space<vmem>>, vector<8x32xf32>
    tpu.vector_store %arg12[%c0_68, %c0_69], %293 {strides = array<i32>} : memref<8x32xf32, #tpu.memory_space<vmem>>, vector<8x32xf32>,
    %c0_70 = arith.constant 0 : index
    %c0_71 = arith.constant 0 : index
    %318 = vector.load %arg13[%c0_70, %c0_71] : memref<8x32xf32, #tpu.memory_space<vmem>>, vector<8x32xf32>
    tpu.vector_store %arg13[%c0_70, %c0_71], %296 {strides = array<i32>} : memref<8x32xf32, #tpu.memory_space<vmem>>, vector<8x32xf32>,
    %c0_i32_72 = arith.constant 0 : i32
    %319 = arith.cmpi eq, %arg1, %c0_i32_72 : i32
    %320 = arith.extui %319 : i1 to i32
    %c0_i32_73 = arith.constant 0 : i32
    %321 = arith.cmpi ne, %320, %c0_i32_73 : i32
    scf.if %321 {
      %c0_74 = arith.constant 0 : index
      %c0_75 = arith.constant 0 : index
      %c0_76 = arith.constant 0 : index
      %322 = vector.load %arg10[%c0_74, %c0_75, %c0_76] : memref<1x8x32xf32, #tpu.memory_space<vmem>>, vector<1x8x32xf32>
      %323 = vector.shape_cast %322 : vector<1x8x32xf32> to vector<8x32xf32>
      %324 = vector.shape_cast %293 : vector<8x32xf32> to vector<1x8x32xf32>
      tpu.vector_store %arg10[%c0_74, %c0_75, %c0_76], %324 {strides = array<i32>} : memref<1x8x32xf32, #tpu.memory_space<vmem>>, vector<1x8x32xf32>,
      %c0_77 = arith.constant 0 : index
      %c0_78 = arith.constant 0 : index
      %c0_79 = arith.constant 0 : index
      %325 = vector.load %arg11[%c0_77, %c0_78, %c0_79] : memref<1x8x32xf32, #tpu.memory_space<vmem>>, vector<1x8x32xf32>
      %326 = vector.shape_cast %325 : vector<1x8x32xf32> to vector<8x32xf32>
      %327 = vector.shape_cast %296 : vector<8x32xf32> to vector<1x8x32xf32>
      tpu.vector_store %arg11[%c0_77, %c0_78, %c0_79], %327 {strides = array<i32>} : memref<1x8x32xf32, #tpu.memory_space<vmem>>, vector<1x8x32xf32>,
    } else {
    }
    return
  }
  func.func @transform_0(%arg0: i32, %arg1: i32) -> (i32, i32, i32) {
    %c0_i32 = arith.constant 0 : i32
    %c0_i32_0 = arith.constant 0 : i32
    return %arg1, %arg0, %c0_i32 : i32, i32, i32
  }
  func.func @transform_1(%arg0: i32, %arg1: i32) -> (i32, i32) {
    %c0_i32 = arith.constant 0 : i32
    %c0_i32_0 = arith.constant 0 : i32
    return %arg0, %c0_i32 : i32, i32
  }
  func.func @transform_2(%arg0: i32, %arg1: i32) -> (i32, i32) {
    %c0_i32 = arith.constant 0 : i32
    %c0_i32_0 = arith.constant 0 : i32
    %c0_i32_1 = arith.constant 0 : i32
    return %c0_i32, %c0_i32_0 : i32, i32
  }
  func.func @transform_3(%arg0: i32, %arg1: i32) -> (i32, i32) {
    %c0_i32 = arith.constant 0 : i32
    %c0_i32_0 = arith.constant 0 : i32
    %c0_i32_1 = arith.constant 0 : i32
    return %c0_i32, %c0_i32_0 : i32, i32
  }
  func.func @transform_4(%arg0: i32, %arg1: i32) -> (i32, i32) {
    %c0_i32 = arith.constant 0 : i32
    %c0_i32_0 = arith.constant 0 : i32
    %c0_i32_1 = arith.constant 0 : i32
    return %c0_i32, %c0_i32_0 : i32, i32
  }
  func.func @transform_5(%arg0: i32, %arg1: i32) -> (i32, i32) {
    %c0_i32 = arith.constant 0 : i32
    %c0_i32_0 = arith.constant 0 : i32
    %c0_i32_1 = arith.constant 0 : i32
    return %c0_i32, %c0_i32_0 : i32, i32
  }
  func.func @transform_6(%arg0: i32, %arg1: i32) -> (i32, i32) {
    %c0_i32 = arith.constant 0 : i32
    %c0_i32_0 = arith.constant 0 : i32
    %c0_i32_1 = arith.constant 0 : i32
    return %c0_i32, %c0_i32_0 : i32, i32
  }
  func.func @transform_7(%arg0: i32, %arg1: i32) -> (i32, i32, i32) {
    %c0_i32 = arith.constant 0 : i32
    %c0_i32_0 = arith.constant 0 : i32
    return %arg1, %arg0, %c0_i32 : i32, i32, i32
  }
  func.func @transform_8(%arg0: i32, %arg1: i32) -> (i32, i32, i32) {
    %c0_i32 = arith.constant 0 : i32
    %c0_i32_0 = arith.constant 0 : i32
    %c0_i32_1 = arith.constant 0 : i32
    return %c0_i32, %arg0, %c0_i32_0 : i32, i32, i32
  }
  func.func @transform_9(%arg0: i32, %arg1: i32) -> (i32, i32, i32) {
    %c0_i32 = arith.constant 0 : i32
    %c0_i32_0 = arith.constant 0 : i32
    %c0_i32_1 = arith.constant 0 : i32
    return %c0_i32, %arg0, %c0_i32_0 : i32, i32, i32
  }
}

</mosaic_0001>

<llo_original>
// kernel: tpu_custom_call.1
$region0: #{tpu_custom_call.1}
  #allocation0 [shape = 'u32[]', space=smem, size = 0x4, offset = 0x4, fixed_abs, tag = 'smem constant byte address 0x4 - core index']
  #allocation1 [shape = 'u32[72,128]{1,0:T(1,128)}', space=vmem, size = 0x9000, scoped, tag = 'internal scratch']
  #allocation2 [shape = 'f32[8,32]{1,0:T(8,128)}', space=vmem, size = 0x1000, scoped, tag = 'scratch operand']
  #allocation3 [shape = 'f32[8,32]{1,0:T(8,128)}', space=vmem, size = 0x1000, scoped, tag = 'scratch operand']
  %s0 = inlined_call_operand.vmem [shape: f32[8,8,16], index: 0, kind: input, shape index: {}]
  %s1 = inlined_call_operand.vmem [shape: s32[8,1], index: 1, kind: input, shape index: {}]
  %s2 = inlined_call_operand.vmem [shape: f32[16,128], index: 2, kind: input, shape index: {}]
  %s3 = inlined_call_operand.vmem [shape: f32[32,128], index: 3, kind: input, shape index: {}]
  %s4 = inlined_call_operand.vmem [shape: f32[1,128], index: 4, kind: input, shape index: {}]
  %s5 = inlined_call_operand.vmem [shape: f32[256,8], index: 5, kind: input, shape index: {}]
  %s6 = inlined_call_operand.vmem [shape: f32[1,8], index: 6, kind: input, shape index: {}]
  %s7 = inlined_call_operand.hbm [shape: f32[1,8,8], index: 7, kind: output, shape index: {0}]
  %s8 = inlined_call_operand.hbm [shape: f32[1,8,32], index: 8, kind: output, shape index: {1}]
  %s9 = inlined_call_operand.hbm [shape: f32[1,8,32], index: 9, kind: output, shape index: {2}]
  %10 = xla_tuple %s7, %s8, %s9
  %s11 = sld [smem:[#allocation0]]
  $region62: #{tpu_custom_call.1} parent=0
    _
  %s13 = ssub.s32 1, %s11
  %s14 = scalar_select 0, %s13, %s11
  $region1: #{tpu_custom_call.1} parent=0
    #allocation4 [shape = 'u8[4096]{0}', space=vmem, size = 0x1000, scoped, tag = 'output window, operand 0, single buffered']
    #allocation5 [shape = 's32[1]{0}', space=sflag, size = 0x4, scoped, tag = 'scoped memory for tpu_custom_call.1']
    #allocation6 [shape = 'u8[4096]{0}', space=vmem, size = 0x1000, scoped, tag = 'output window, operand 1, single buffered']
    #allocation7 [shape = 's32[1]{0}', space=sflag, size = 0x4, scoped, tag = 'scoped memory for tpu_custom_call.1']
    #allocation8 [shape = 'u8[4096]{0}', space=vmem, size = 0x1000, scoped, tag = 'output window, operand 2, single buffered']
    %15 = vsyncpa [#allocation5], 0
    %16 = vsyncpa [#allocation7], 0
    // Predicated region
    $region2: #{tpu_custom_call.1} parent=1 // pred_check
      _
    $region3: #{tpu_custom_call.1} parent=1 // pred_check_branch
      %18 = sbr.rel (0) target = $region5
    $region4: #{tpu_custom_call.1} parent=1 // pred_region
      _
    $region5: #{tpu_custom_call.1} parent=1 // pred_fallthru
      _
    // Predicated region
    $region6: #{tpu_custom_call.1} parent=1 // pred_check
      _
    $region7: #{tpu_custom_call.1} parent=1 // pred_check_branch
      %20 = sbr.rel (0) target = $region9
    $region8: #{tpu_custom_call.1} parent=1 // pred_region
      _
    $region9: #{tpu_custom_call.1} parent=1 // pred_fallthru
      _
    // Predicated region
    $region10: #{tpu_custom_call.1} parent=1 // pred_check
      _
    $region11: #{tpu_custom_call.1} parent=1 // pred_check_branch
      %22 = sbr.rel (0) target = $region13
    $region12: #{tpu_custom_call.1} parent=1 // pred_region
      _
    $region13: #{tpu_custom_call.1} parent=1 // pred_fallthru
      _
    // Predicated region
    $region14: #{tpu_custom_call.1} parent=1 // pred_check
      _
    $region15: #{tpu_custom_call.1} parent=1 // pred_check_branch
      %24 = sbr.rel (0) target = $region17
    $region16: #{tpu_custom_call.1} parent=1 // pred_region
      _
    $region17: #{tpu_custom_call.1} parent=1 // pred_fallthru
      _
    // Predicated region
    $region18: #{tpu_custom_call.1} parent=1 // pred_check
      _
    $region19: #{tpu_custom_call.1} parent=1 // pred_check_branch
      %26 = sbr.rel (0) target = $region21
    $region20: #{tpu_custom_call.1} parent=1 // pred_region
      _
    $region21: #{tpu_custom_call.1} parent=1 // pred_fallthru
      _
    // Predicated region
    $region22: #{tpu_custom_call.1} parent=1 // pred_check
      _
    $region23: #{tpu_custom_call.1} parent=1 // pred_check_branch
      %28 = sbr.rel (0) target = $region25
    $region24: #{tpu_custom_call.1} parent=1 // pred_region
      _
    $region25: #{tpu_custom_call.1} parent=1 // pred_fallthru
      _
    // Predicated region
    $region26: #{tpu_custom_call.1} parent=1 // pred_check
      _
    $region27: #{tpu_custom_call.1} parent=1 // pred_check_branch
      %30 = sbr.rel (0) target = $region29
    $region28: #{tpu_custom_call.1} parent=1 // pred_region
      _
    $region29: #{tpu_custom_call.1} parent=1 // pred_fallthru
      _
    %p31 = scmp.eq.s32.totalorder 0, 0
    // Predicated region
    $region30: #{tpu_custom_call.1} parent=1 // pred_check
      %p32 = pneg %p31
    $region31: #{tpu_custom_call.1} parent=1 // pred_check_branch
      %34 = sbr.rel (%p32) target = $region33
    $region32: #{tpu_custom_call.1} parent=1 // pred_region
      %vm35 = vcmask 261120
      %36 = vst.msk [vmem:[#allocation2] sm:$0xff] %vm35, 0.0
      %37 = vst.msk [vmem:[#allocation3] sm:$0xff] %vm35, 0.0
    $region33: #{tpu_custom_call.1} parent=1 // pred_fallthru
      _
    %v38 = vld [vmem:[%s0] sm:$0xff]
    %v39 = vld [vmem:[%s0 + $0x8] sm:$0xff]
    %v40 = vld [vmem:[%s0 + $0x10] sm:$0xff]
    %v41 = vld [vmem:[%s0 + $0x18] sm:$0xff]
    %v42 = vld [vmem:[%s0 + $0x20] sm:$0xff]
    %v43 = vld [vmem:[%s0 + $0x28] sm:$0xff]
    %v44 = vld [vmem:[%s0 + $0x30] sm:$0xff]
    %v45 = vld [vmem:[%s0 + $0x38] sm:$0xff]
    %v46 = vld [vmem:[%s2] sm:$0xff]
    %v47 = vld [vmem:[%s2 + $0x8] sm:$0xff]
    %vm48 = vcmask 130048
    %v50 = vsel %vm48, %v38, 0
    %v53 = vsel %vm48, %v39, 0
    %v56 = vsel %vm48, %v40, 0
    %v59 = vsel %vm48, %v41, 0
    %v62 = vsel %vm48, %v42, 0
    %v65 = vsel %vm48, %v43, 0
    %v68 = vsel %vm48, %v44, 0
    %v71 = vsel %vm48, %v45, 0
    %73 = vmatpush.msra.mxu0 0.0
    %74 = vmatpush.msra.mxu0 0.0
    %75 = vmatpush.msra.mxu0 0.0
    %76 = vmatpush.msra.mxu0 0.0
    %77 = vmatpush.msra.mxu0 0.0
    %78 = vmatpush.msra.mxu0 0.0
    %79 = vmatpush.msra.mxu0 0.0
    %80 = vmatpush.msra.mxu0 0.0
    %81 = vmatpush.msra.mxu0 0.0
    %82 = vmatpush.msra.mxu0 0.0
    %83 = vmatpush.msra.mxu0 0.0
    %84 = vmatpush.msra.mxu0 0.0
    %85 = vmatpush.msra.mxu0 0.0
    %86 = vmatpush.msra.mxu0 0.0
    %87 = vmatpush.msra.mxu0 %v47
    %88 = vmatpush.msra.mxu0 %v46
    %89 = vmatmul.f32.gmra.mxu0 %v50
    %v90 = vpop.f32.mrf.mxu0
    %v91 = vadd.f32 0.0, %v90
    %92 = vmatmul.f32.gmra.mxu0 %v53
    %v93 = vpop.f32.mrf.mxu0
    %v94 = vadd.f32 0.0, %v93
    %95 = vmatmul.f32.gmra.mxu0 %v56
    %v96 = vpop.f32.mrf.mxu0
    %v97 = vadd.f32 0.0, %v96
    %98 = vmatmul.f32.gmra.mxu0 %v59
    %v99 = vpop.f32.mrf.mxu0
    %v100 = vadd.f32 0.0, %v99
    %101 = vmatmul.f32.gmra.mxu0 %v62
    %v102 = vpop.f32.mrf.mxu0
    %v103 = vadd.f32 0.0, %v102
    %104 = vmatmul.f32.gmra.mxu0 %v65
    %v105 = vpop.f32.mrf.mxu0
    %v106 = vadd.f32 0.0, %v105
    %107 = vmatmul.f32.gmra.mxu0 %v68
    %v108 = vpop.f32.mrf.mxu0
    %v109 = vadd.f32 0.0, %v108
    %110 = vmatmul.f32.gmra.mxu0 %v71
    %v111 = vpop.f32.mrf.mxu0
    %v112 = vadd.f32 0.0, %v111
    %113 = vdwg.mxu0
    %v114 = vld [vmem:[%s3] sm:$0xff]
    %v115 = vld [vmem:[%s3 + $0x8] sm:$0xff]
    %v116 = vld [vmem:[%s3 + $0x10] sm:$0xff]
    %v117 = vld [vmem:[%s3 + $0x18] sm:$0xff]
    %v118 = vld [vmem:[%s4] sm:$0x1]
    %v119 = vld [vmem:[%s1] sm:$0xff]
    %v120 = vlaneseq
    %v121 = vand.u32 %v120, 127
    %vm122 = vcmp.ge.s32.totalorder %v121, 64
    %vm123 = vcmp.lt.s32.totalorder %v121, 96
    %vm124 = vmand %vm122, %vm123
    %v125 = vsel %vm124, 1.0, 0.5
    %v126 = vld [vmem:[#allocation2] sm:$0xff]
    %v127 = vld [vmem:[#allocation3] sm:$0xff]
    %vm128 = vcmask 261120
    %v130 = vsel %vm128, %v126, 0
    %132 = vmatpush.msra.mxu0 0.0
    %133 = vmatpush.msra.mxu0 0.0
    %134 = vmatpush.msra.mxu0 0.0
    %135 = vmatpush.msra.mxu0 0.0
    %136 = vmatpush.msra.mxu0 0.0
    %137 = vmatpush.msra.mxu0 0.0
    %138 = vmatpush.msra.mxu0 0.0
    %139 = vmatpush.msra.mxu0 0.0
    %140 = vmatpush.msra.mxu0 0.0
    %141 = vmatpush.msra.mxu0 0.0
    %142 = vmatpush.msra.mxu0 0.0
    %143 = vmatpush.msra.mxu0 0.0
    %144 = vmatpush.msra.mxu0 %v117
    %145 = vmatpush.msra.mxu0 %v116
    %146 = vmatpush.msra.mxu0 %v115
    %147 = vmatpush.msra.mxu0 %v114
    %148 = vmatmul.f32.gmra.mxu0 %v130
    %v149 = vpop.f32.mrf.mxu0
    %v150 = vadd.f32 0.0, %v149
    %151 = vdwg.mxu0
    %v152 = vadd.f32 %v91, %v150
    %v154 = vperm.slane %v118, 0
    %v156 = vadd.f32 %v152, %v154
    %v157 = vmul.f32 %v156, %v125
    %v158 = vtanh.pop %v157
    %v159 = vadd.f32 %v158, 1.0
    %v160 = vmul.f32 %v159, 0.5
    %v161 = vsel %vm124, %v158, %v160
    %163 = vrot.lane.b32.xlu0 %v127, 32
    %v164 = vpop.permute.xlu0 %163
    %v166 = vmul.f32 %v161, %v164
    %168 = vrot.lane.b32.xlu0 %v161, 64
    %v169 = vpop.permute.xlu0 %168
    %v171 = vmul.f32 %v161, %v169
    %173 = vrot.lane.b32.xlu0 %v171, 32
    %v174 = vpop.permute.xlu0 %173
    %v176 = vadd.f32 %v166, %v174
    %v177 = vtanh.pop %v176
    %179 = vrot.lane.b32.xlu0 %v177, 64
    %v180 = vpop.permute.xlu0 %179
    %v182 = vmul.f32 %v161, %v180
    %s183 = smul.u32 0, 8
    %v184 = vstv %s183
    %vm185 = vcmp.lt.s32.totalorder %v184, %v119
    %v186 = vsel %vm185, 1, 0
    %187 = vset.pattern.permute.xlu0 0
    %188 = vperm.xlu0 %187, %v186
    %v189 = vpop.permute.xlu0 %188
    %vm190 = vcmp.eq.s32.totalorder %v189, 1
    %191 = vrot.lane.b32.xlu0 %v126, 96
    %v192 = vpop.permute.xlu0 %191
    %v194 = vsel %vm190, %v182, %v192
    %v195 = vsel %vm190, %v176, %v164
    %v196 = vsel %vm190, %v182, 0.0
    %198 = vrot.lane.b32.xlu0 %v194, 32
    %v199 = vpop.permute.xlu0 %198
    %v200 = vsel %vm128, %v199, 0
    %202 = vmatpush.msra.mxu0 0.0
    %203 = vmatpush.msra.mxu0 0.0
    %204 = vmatpush.msra.mxu0 0.0
    %205 = vmatpush.msra.mxu0 0.0
    %206 = vmatpush.msra.mxu0 0.0
    %207 = vmatpush.msra.mxu0 0.0
    %208 = vmatpush.msra.mxu0 0.0
    %209 = vmatpush.msra.mxu0 0.0
    %210 = vmatpush.msra.mxu0 0.0
    %211 = vmatpush.msra.mxu0 0.0
    %212 = vmatpush.msra.mxu0 0.0
    %213 = vmatpush.msra.mxu0 0.0
    %214 = vmatpush.msra.mxu0 %v117
    %215 = vmatpush.msra.mxu0 %v116
    %216 = vmatpush.msra.mxu0 %v115
    %217 = vmatpush.msra.mxu0 %v114
    %218 = vmatmul.f32.gmra.mxu0 %v200
    %v219 = vpop.f32.mrf.mxu0
    %v220 = vadd.f32 0.0, %v219
    %221 = vdwg.mxu0
    %v222 = vadd.f32 %v94, %v220
    %v223 = vadd.f32 %v222, %v154
    %v224 = vmul.f32 %v223, %v125
    %v225 = vtanh.pop %v224
    %v226 = vadd.f32 %v225, 1.0
    %v227 = vmul.f32 %v226, 0.5
    %v228 = vsel %vm124, %v225, %v227
    %v229 = vmul.f32 %v228, %v195
    %231 = vrot.lane.b32.xlu0 %v228, 64
    %v232 = vpop.permute.xlu0 %231
    %v234 = vmul.f32 %v228, %v232
    %236 = vrot.lane.b32.xlu0 %v234, 32
    %v237 = vpop.permute.xlu0 %236
    %v239 = vadd.f32 %v229, %v237
    %v240 = vtanh.pop %v239
    %242 = vrot.lane.b32.xlu0 %v240, 64
    %v243 = vpop.permute.xlu0 %242
    %v245 = vmul.f32 %v228, %v243
    %s246 = sadd.s32 %s183, 1
    %v247 = vstv %s246
    %vm248 = vcmp.lt.s32.totalorder %v247, %v119
    %v249 = vsel %vm248, 1, 0
    %250 = vset.pattern.permute.xlu0 0
    %251 = vperm.xlu0 %250, %v249
    %v252 = vpop.permute.xlu0 %251
    %vm253 = vcmp.eq.s32.totalorder %v252, 1
    %v254 = vsel %vm253, %v245, %v194
    %v255 = vsel %vm253, %v239, %v195
    %v256 = vsel %vm253, %v245, 0.0
    %258 = vrot.lane.b32.xlu0 %v254, 32
    %v259 = vpop.permute.xlu0 %258
    %v260 = vsel %vm128, %v259, 0
    %262 = vmatpush.msra.mxu0 0.0
    %263 = vmatpush.msra.mxu0 0.0
    %264 = vmatpush.msra.mxu0 0.0
    %265 = vmatpush.msra.mxu0 0.0
    %266 = vmatpush.msra.mxu0 0.0
    %267 = vmatpush.msra.mxu0 0.0
    %268 = vmatpush.msra.mxu0 0.0
    %269 = vmatpush.msra.mxu0 0.0
    %270 = vmatpush.msra.mxu0 0.0
    %271 = vmatpush.msra.mxu0 0.0
    %272 = vmatpush.msra.mxu0 0.0
    %273 = vmatpush.msra.mxu0 0.0
    %274 = vmatpush.msra.mxu0 %v117
    %275 = vmatpush.msra.mxu0 %v116
    %276 = vmatpush.msra.mxu0 %v115
    %277 = vmatpush.msra.mxu0 %v114
    %278 = vmatmul.f32.gmra.mxu0 %v260
    %v279 = vpop.f32.mrf.mxu0
    %v280 = vadd.f32 0.0, %v279
    %281 = vdwg.mxu0
    %v282 = vadd.f32 %v97, %v280
    %v283 = vadd.f32 %v282, %v154
    %v284 = vmul.f32 %v283, %v125
    %v285 = vtanh.pop %v284
    %v286 = vadd.f32 %v285, 1.0
    %v287 = vmul.f32 %v286, 0.5
    %v288 = vsel %vm124, %v285, %v287
    %v289 = vmul.f32 %v288, %v255
    %291 = vrot.lane.b32.xlu0 %v288, 64
    %v292 = vpop.permute.xlu0 %291
    %v294 = vmul.f32 %v288, %v292
    %296 = vrot.lane.b32.xlu0 %v294, 32
    %v297 = vpop.permute.xlu0 %296
    %v299 = vadd.f32 %v289, %v297
    %v300 = vtanh.pop %v299
    %302 = vrot.lane.b32.xlu0 %v300, 64
    %v303 = vpop.permute.xlu0 %302
    %v305 = vmul.f32 %v288, %v303
    %s306 = sadd.s32 %s183, 2
    %v307 = vstv %s306
    %vm308 = vcmp.lt.s32.totalorder %v307, %v119
    %v309 = vsel %vm308, 1, 0
    %310 = vset.pattern.permute.xlu0 0
    %311 = vperm.xlu0 %310, %v309
    %v312 = vpop.permute.xlu0 %311
    %vm313 = vcmp.eq.s32.totalorder %v312, 1
    %v314 = vsel %vm313, %v305, %v254
    %v315 = vsel %vm313, %v299, %v255
    %v316 = vsel %vm313, %v305, 0.0
    %318 = vrot.lane.b32.xlu0 %v314, 32
    %v319 = vpop.permute.xlu0 %318
    %v320 = vsel %vm128, %v319, 0
    %322 = vmatpush.msra.mxu0 0.0
    %323 = vmatpush.msra.mxu0 0.0
    %324 = vmatpush.msra.mxu0 0.0
    %325 = vmatpush.msra.mxu0 0.0
    %326 = vmatpush.msra.mxu0 0.0
    %327 = vmatpush.msra.mxu0 0.0
    %328 = vmatpush.msra.mxu0 0.0
    %329 = vmatpush.msra.mxu0 0.0
    %330 = vmatpush.msra.mxu0 0.0
    %331 = vmatpush.msra.mxu0 0.0
    %332 = vmatpush.msra.mxu0 0.0
    %333 = vmatpush.msra.mxu0 0.0
    %334 = vmatpush.msra.mxu0 %v117
    %335 = vmatpush.msra.mxu0 %v116
    %336 = vmatpush.msra.mxu0 %v115
    %337 = vmatpush.msra.mxu0 %v114
    %338 = vmatmul.f32.gmra.mxu0 %v320
    %v339 = vpop.f32.mrf.mxu0
    %v340 = vadd.f32 0.0, %v339
    %341 = vdwg.mxu0
    %v342 = vadd.f32 %v100, %v340
    %v343 = vadd.f32 %v342, %v154
    %v344 = vmul.f32 %v343, %v125
    %v345 = vtanh.pop %v344
    %v346 = vadd.f32 %v345, 1.0
    %v347 = vmul.f32 %v346, 0.5
    %v348 = vsel %vm124, %v345, %v347
    %v349 = vmul.f32 %v348, %v315
    %351 = vrot.lane.b32.xlu0 %v348, 64
    %v352 = vpop.permute.xlu0 %351
    %v354 = vmul.f32 %v348, %v352
    %356 = vrot.lane.b32.xlu0 %v354, 32
    %v357 = vpop.permute.xlu0 %356
    %v359 = vadd.f32 %v349, %v357
    %v360 = vtanh.pop %v359
    %362 = vrot.lane.b32.xlu0 %v360, 64
    %v363 = vpop.permute.xlu0 %362
    %v365 = vmul.f32 %v348, %v363
    %s366 = sadd.s32 %s183, 3
    %v367 = vstv %s366
    %vm368 = vcmp.lt.s32.totalorder %v367, %v119
    %v369 = vsel %vm368, 1, 0
    %370 = vset.pattern.permute.xlu0 0
    %371 = vperm.xlu0 %370, %v369
    %v372 = vpop.permute.xlu0 %371
    %vm373 = vcmp.eq.s32.totalorder %v372, 1
    %v374 = vsel %vm373, %v365, %v314
    %v375 = vsel %vm373, %v359, %v315
    %v376 = vsel %vm373, %v365, 0.0
    %378 = vrot.lane.b32.xlu0 %v374, 32
    %v379 = vpop.permute.xlu0 %378
    %v380 = vsel %vm128, %v379, 0
    %382 = vmatpush.msra.mxu0 0.0
    %383 = vmatpush.msra.mxu0 0.0
    %384 = vmatpush.msra.mxu0 0.0
    %385 = vmatpush.msra.mxu0 0.0
    %386 = vmatpush.msra.mxu0 0.0
    %387 = vmatpush.msra.mxu0 0.0
    %388 = vmatpush.msra.mxu0 0.0
    %389 = vmatpush.msra.mxu0 0.0
    %390 = vmatpush.msra.mxu0 0.0
    %391 = vmatpush.msra.mxu0 0.0
    %392 = vmatpush.msra.mxu0 0.0
    %393 = vmatpush.msra.mxu0 0.0
    %394 = vmatpush.msra.mxu0 %v117
    %395 = vmatpush.msra.mxu0 %v116
    %396 = vmatpush.msra.mxu0 %v115
    %397 = vmatpush.msra.mxu0 %v114
    %398 = vmatmul.f32.gmra.mxu0 %v380
    %v399 = vpop.f32.mrf.mxu0
    %v400 = vadd.f32 0.0, %v399
    %401 = vdwg.mxu0
    %v402 = vadd.f32 %v103, %v400
    %v403 = vadd.f32 %v402, %v154
    %v404 = vmul.f32 %v403, %v125
    %v405 = vtanh.pop %v404
    %v406 = vadd.f32 %v405, 1.0
    %v407 = vmul.f32 %v406, 0.5
    %v408 = vsel %vm124, %v405, %v407
    %v409 = vmul.f32 %v408, %v375
    %411 = vrot.lane.b32.xlu0 %v408, 64
    %v412 = vpop.permute.xlu0 %411
    %v414 = vmul.f32 %v408, %v412
    %416 = vrot.lane.b32.xlu0 %v414, 32
    %v417 = vpop.permute.xlu0 %416
    %v419 = vadd.f32 %v409, %v417
    %v420 = vtanh.pop %v419
    %422 = vrot.lane.b32.xlu0 %v420, 64
    %v423 = vpop.permute.xlu0 %422
    %v425 = vmul.f32 %v408, %v423
    %s426 = sadd.s32 %s183, 4
    %v427 = vstv %s426
    %vm428 = vcmp.lt.s32.totalorder %v427, %v119
    %v429 = vsel %vm428, 1, 0
    %430 = vset.pattern.permute.xlu0 0
    %431 = vperm.xlu0 %430, %v429
    %v432 = vpop.permute.xlu0 %431
    %vm433 = vcmp.eq.s32.totalorder %v432, 1
    %v434 = vsel %vm433, %v425, %v374
    %v435 = vsel %vm433, %v419, %v375
    %v436 = vsel %vm433, %v425, 0.0
    %438 = vrot.lane.b32.xlu0 %v434, 32
    %v439 = vpop.permute.xlu0 %438
    %v440 = vsel %vm128, %v439, 0
    %442 = vmatpush.msra.mxu0 0.0
    %443 = vmatpush.msra.mxu0 0.0
    %444 = vmatpush.msra.mxu0 0.0
    %445 = vmatpush.msra.mxu0 0.0
    %446 = vmatpush.msra.mxu0 0.0
    %447 = vmatpush.msra.mxu0 0.0
    %448 = vmatpush.msra.mxu0 0.0
    %449 = vmatpush.msra.mxu0 0.0
    %450 = vmatpush.msra.mxu0 0.0
    %451 = vmatpush.msra.mxu0 0.0
    %452 = vmatpush.msra.mxu0 0.0
    %453 = vmatpush.msra.mxu0 0.0
    %454 = vmatpush.msra.mxu0 %v117
    %455 = vmatpush.msra.mxu0 %v116
    %456 = vmatpush.msra.mxu0 %v115
    %457 = vmatpush.msra.mxu0 %v114
    %458 = vmatmul.f32.gmra.mxu0 %v440
    %v459 = vpop.f32.mrf.mxu0
    %v460 = vadd.f32 0.0, %v459
    %461 = vdwg.mxu0
    %v462 = vadd.f32 %v106, %v460
    %v463 = vadd.f32 %v462, %v154
    %v464 = vmul.f32 %v463, %v125
    %v465 = vtanh.pop %v464
    %v466 = vadd.f32 %v465, 1.0
    %v467 = vmul.f32 %v466, 0.5
    %v468 = vsel %vm124, %v465, %v467
    %v469 = vmul.f32 %v468, %v435
    %471 = vrot.lane.b32.xlu0 %v468, 64
    %v472 = vpop.permute.xlu0 %471
    %v474 = vmul.f32 %v468, %v472
    %476 = vrot.lane.b32.xlu0 %v474, 32
    %v477 = vpop.permute.xlu0 %476
    %v479 = vadd.f32 %v469, %v477
    %v480 = vtanh.pop %v479
    %482 = vrot.lane.b32.xlu0 %v480, 64
    %v483 = vpop.permute.xlu0 %482
    %v485 = vmul.f32 %v468, %v483
    %s486 = sadd.s32 %s183, 5
    %v487 = vstv %s486
    %vm488 = vcmp.lt.s32.totalorder %v487, %v119
    %v489 = vsel %vm488, 1, 0
    %490 = vset.pattern.permute.xlu0 0
    %491 = vperm.xlu0 %490, %v489
    %v492 = vpop.permute.xlu0 %491
    %vm493 = vcmp.eq.s32.totalorder %v492, 1
    %v494 = vsel %vm493, %v485, %v434
    %v495 = vsel %vm493, %v479, %v435
    %v496 = vsel %vm493, %v485, 0.0
    %498 = vrot.lane.b32.xlu0 %v494, 32
    %v499 = vpop.permute.xlu0 %498
    %v500 = vsel %vm128, %v499, 0
    %502 = vmatpush.msra.mxu0 0.0
    %503 = vmatpush.msra.mxu0 0.0
    %504 = vmatpush.msra.mxu0 0.0
    %505 = vmatpush.msra.mxu0 0.0
    %506 = vmatpush.msra.mxu0 0.0
    %507 = vmatpush.msra.mxu0 0.0
    %508 = vmatpush.msra.mxu0 0.0
    %509 = vmatpush.msra.mxu0 0.0
    %510 = vmatpush.msra.mxu0 0.0
    %511 = vmatpush.msra.mxu0 0.0
    %512 = vmatpush.msra.mxu0 0.0
    %513 = vmatpush.msra.mxu0 0.0
    %514 = vmatpush.msra.mxu0 %v117
    %515 = vmatpush.msra.mxu0 %v116
    %516 = vmatpush.msra.mxu0 %v115
    %517 = vmatpush.msra.mxu0 %v114
    %518 = vmatmul.f32.gmra.mxu0 %v500
    %v519 = vpop.f32.mrf.mxu0
    %v520 = vadd.f32 0.0, %v519
    %521 = vdwg.mxu0
    %v522 = vadd.f32 %v109, %v520
    %v523 = vadd.f32 %v522, %v154
    %v524 = vmul.f32 %v523, %v125
    %v525 = vtanh.pop %v524
    %v526 = vadd.f32 %v525, 1.0
    %v527 = vmul.f32 %v526, 0.5
    %v528 = vsel %vm124, %v525, %v527
    %v529 = vmul.f32 %v528, %v495
    %531 = vrot.lane.b32.xlu0 %v528, 64
    %v532 = vpop.permute.xlu0 %531
    %v534 = vmul.f32 %v528, %v532
    %536 = vrot.lane.b32.xlu0 %v534, 32
    %v537 = vpop.permute.xlu0 %536
    %v539 = vadd.f32 %v529, %v537
    %v540 = vtanh.pop %v539
    %542 = vrot.lane.b32.xlu0 %v540, 64
    %v543 = vpop.permute.xlu0 %542
    %v545 = vmul.f32 %v528, %v543
    %s546 = sadd.s32 %s183, 6
    %v547 = vstv %s546
    %vm548 = vcmp.lt.s32.totalorder %v547, %v119
    %v549 = vsel %vm548, 1, 0
    %550 = vset.pattern.permute.xlu0 0
    %551 = vperm.xlu0 %550, %v549
    %v552 = vpop.permute.xlu0 %551
    %vm553 = vcmp.eq.s32.totalorder %v552, 1
    %v554 = vsel %vm553, %v545, %v494
    %v555 = vsel %vm553, %v539, %v495
    %v556 = vsel %vm553, %v545, 0.0
    %558 = vrot.lane.b32.xlu0 %v554, 32
    %v559 = vpop.permute.xlu0 %558
    %v560 = vsel %vm128, %v559, 0
    %562 = vmatpush.msra.mxu0 0.0
    %563 = vmatpush.msra.mxu0 0.0
    %564 = vmatpush.msra.mxu0 0.0
    %565 = vmatpush.msra.mxu0 0.0
    %566 = vmatpush.msra.mxu0 0.0
    %567 = vmatpush.msra.mxu0 0.0
    %568 = vmatpush.msra.mxu0 0.0
    %569 = vmatpush.msra.mxu0 0.0
    %570 = vmatpush.msra.mxu0 0.0
    %571 = vmatpush.msra.mxu0 0.0
    %572 = vmatpush.msra.mxu0 0.0
    %573 = vmatpush.msra.mxu0 0.0
    %574 = vmatpush.msra.mxu0 %v117
    %575 = vmatpush.msra.mxu0 %v116
    %576 = vmatpush.msra.mxu0 %v115
    %577 = vmatpush.msra.mxu0 %v114
    %578 = vmatmul.f32.gmra.mxu0 %v560
    %v579 = vpop.f32.mrf.mxu0
    %v580 = vadd.f32 0.0, %v579
    %581 = vdwg.mxu0
    %v582 = vadd.f32 %v112, %v580
    %v583 = vadd.f32 %v582, %v154
    %v584 = vmul.f32 %v583, %v125
    %v585 = vtanh.pop %v584
    %v586 = vadd.f32 %v585, 1.0
    %v587 = vmul.f32 %v586, 0.5
    %v588 = vsel %vm124, %v585, %v587
    %v589 = vmul.f32 %v588, %v555
    %591 = vrot.lane.b32.xlu0 %v588, 64
    %v592 = vpop.permute.xlu0 %591
    %v594 = vmul.f32 %v588, %v592
    %596 = vrot.lane.b32.xlu0 %v594, 32
    %v597 = vpop.permute.xlu0 %596
    %v599 = vadd.f32 %v589, %v597
    %v600 = vtanh.pop %v599
    %602 = vrot.lane.b32.xlu0 %v600, 64
    %v603 = vpop.permute.xlu0 %602
    %v605 = vmul.f32 %v588, %v603
    %s606 = sadd.s32 %s183, 7
    %v607 = vstv %s606
    %vm608 = vcmp.lt.s32.totalorder %v607, %v119
    %v609 = vsel %vm608, 1, 0
    %610 = vset.pattern.permute.xlu0 0
    %611 = vperm.xlu0 %610, %v609
    %v612 = vpop.permute.xlu0 %611
    %vm613 = vcmp.eq.s32.totalorder %v612, 1
    %v614 = vsel %vm613, %v605, %v554
    %v615 = vsel %vm613, %v599, %v555
    %v616 = vsel %vm613, %v605, 0.0
    %618 = vrot.lane.b32.xlu0 %v196, 32
    %v619 = vpop.permute.xlu0 %618
    %622 = vrot.lane.b32.xlu0 %v256, 64
    %v623 = vpop.permute.xlu0 %622
    %626 = vrot.lane.b32.xlu0 %v316, 96
    %v627 = vpop.permute.xlu0 %626
    %630 = vrot.lane.b32.xlu0 %v436, 32
    %v631 = vpop.permute.xlu0 %630
    %634 = vrot.lane.b32.xlu0 %v496, 64
    %v635 = vpop.permute.xlu0 %634
    %638 = vrot.lane.b32.xlu0 %v556, 96
    %v639 = vpop.permute.xlu0 %638
    %v641 = vsel %vm128, %v619, %v623
    %vm642 = vcmask 523264
    %v643 = vsel %vm642, %v641, %v627
    %vm644 = vcmask 785408
    %v645 = vsel %vm644, %v643, %v376
    %v646 = vsel %vm128, %v631, %v635
    %v647 = vsel %vm642, %v646, %v639
    %v648 = vsel %vm644, %v647, %v616
    %v649 = vld [vmem:[%s5] sm:$0xff]
    %v650 = vld [vmem:[%s5 + $0x8] sm:$0xff]
    %v651 = vld [vmem:[%s5 + $0x10] sm:$0xff]
    %v652 = vld [vmem:[%s5 + $0x18] sm:$0xff]
    %v653 = vld [vmem:[%s5 + $0x20] sm:$0xff]
    %v654 = vld [vmem:[%s5 + $0x28] sm:$0xff]
    %v655 = vld [vmem:[%s5 + $0x30] sm:$0xff]
    %v656 = vld [vmem:[%s5 + $0x38] sm:$0xff]
    %v657 = vld [vmem:[%s5 + $0x40] sm:$0xff]
    %v658 = vld [vmem:[%s5 + $0x48] sm:$0xff]
    %v659 = vld [vmem:[%s5 + $0x50] sm:$0xff]
    %v660 = vld [vmem:[%s5 + $0x58] sm:$0xff]
    %v661 = vld [vmem:[%s5 + $0x60] sm:$0xff]
    %v662 = vld [vmem:[%s5 + $0x68] sm:$0xff]
    %v663 = vld [vmem:[%s5 + $0x70] sm:$0xff]
    %v664 = vld [vmem:[%s5 + $0x78] sm:$0xff]
    %v665 = vld [vmem:[%s5 + $0x80] sm:$0xff]
    %v666 = vld [vmem:[%s5 + $0x88] sm:$0xff]
    %v667 = vld [vmem:[%s5 + $0x90] sm:$0xff]
    %v668 = vld [vmem:[%s5 + $0x98] sm:$0xff]
    %v669 = vld [vmem:[%s5 + $0xa0] sm:$0xff]
    %v670 = vld [vmem:[%s5 + $0xa8] sm:$0xff]
    %v671 = vld [vmem:[%s5 + $0xb0] sm:$0xff]
    %v672 = vld [vmem:[%s5 + $0xb8] sm:$0xff]
    %v673 = vld [vmem:[%s5 + $0xc0] sm:$0xff]
    %v674 = vld [vmem:[%s5 + $0xc8] sm:$0xff]
    %v675 = vld [vmem:[%s5 + $0xd0] sm:$0xff]
    %v676 = vld [vmem:[%s5 + $0xd8] sm:$0xff]
    %v677 = vld [vmem:[%s5 + $0xe0] sm:$0xff]
    %v678 = vld [vmem:[%s5 + $0xe8] sm:$0xff]
    %v679 = vld [vmem:[%s5 + $0xf0] sm:$0xff]
    %v680 = vld [vmem:[%s5 + $0xf8] sm:$0xff]
    %v681 = vld [vmem:[%s6] sm:$0x1]
    %v683 = vperm.slane %v681, 0
    %685 = vmatpush.msra.mxu0 %v664
    %686 = vmatpush.msra.mxu0 %v663
    %687 = vmatpush.msra.mxu0 %v662
    %688 = vmatpush.msra.mxu0 %v661
    %689 = vmatpush.msra.mxu0 %v660
    %690 = vmatpush.msra.mxu0 %v659
    %691 = vmatpush.msra.mxu0 %v658
    %692 = vmatpush.msra.mxu0 %v657
    %693 = vmatpush.msra.mxu0 %v656
    %694 = vmatpush.msra.mxu0 %v655
    %695 = vmatpush.msra.mxu0 %v654
    %696 = vmatpush.msra.mxu0 %v653
    %697 = vmatpush.msra.mxu0 %v652
    %698 = vmatpush.msra.mxu0 %v651
    %699 = vmatpush.msra.mxu0 %v650
    %700 = vmatpush.msra.mxu0 %v649
    %701 = vmatmul.f32.gmra.mxu0 %v645
    %v702 = vpop.f32.mrf.mxu0
    %v703 = vadd.f32 %v683, %v702
    %704 = vdwg.mxu0
    %705 = vmatpush.msra.mxu0 %v680
    %706 = vmatpush.msra.mxu0 %v679
    %707 = vmatpush.msra.mxu0 %v678
    %708 = vmatpush.msra.mxu0 %v677
    %709 = vmatpush.msra.mxu0 %v676
    %710 = vmatpush.msra.mxu0 %v675
    %711 = vmatpush.msra.mxu0 %v674
    %712 = vmatpush.msra.mxu0 %v673
    %713 = vmatpush.msra.mxu0 %v672
    %714 = vmatpush.msra.mxu0 %v671
    %715 = vmatpush.msra.mxu0 %v670
    %716 = vmatpush.msra.mxu0 %v669
    %717 = vmatpush.msra.mxu0 %v668
    %718 = vmatpush.msra.mxu0 %v667
    %719 = vmatpush.msra.mxu0 %v666
    %720 = vmatpush.msra.mxu0 %v665
    %721 = vmatmul.f32.gmra.mxu0 %v648
    %v722 = vpop.f32.mrf.mxu0
    %v723 = vadd.f32 %v703, %v722
    %724 = vdwg.mxu0
    %v725 = vmul.f32 %v723, 0.5
    %v726 = vtanh.pop %v725
    %v727 = vadd.f32 %v726, 1.0
    %v728 = vmul.f32 %v727, 0.5
    %vm729 = vcmask 64512
    %730 = vst.msk [vmem:[#allocation4] sm:$0xff] %vm729, %v728
    %732 = vrot.lane.b32.xlu0 %v614, 32
    %v733 = vpop.permute.xlu0 %732
    %735 = vst.msk [vmem:[#allocation2] sm:$0xff] %vm128, %v733
    %737 = vrot.lane.b32.xlu0 %v615, 96
    %v738 = vpop.permute.xlu0 %737
    %740 = vst.msk [vmem:[#allocation3] sm:$0xff] %vm128, %v738
    // Predicated region
    $region34: #{tpu_custom_call.1} parent=1 // pred_check
      %p741 = pneg %p31
    $region35: #{tpu_custom_call.1} parent=1 // pred_check_branch
      %743 = sbr.rel (%p741) target = $region37
    $region36: #{tpu_custom_call.1} parent=1 // pred_region
      %744 = vst.msk [vmem:[#allocation6] sm:$0xff] %vm128, %v733
      %745 = vst.msk [vmem:[#allocation8] sm:$0xff] %vm128, %v738
    $region37: #{tpu_custom_call.1} parent=1 // pred_fallthru
      _
    // Predicated region
    $region38: #{tpu_custom_call.1} parent=1 // pred_check
      _
    $region39: #{tpu_custom_call.1} parent=1 // pred_check_branch
      %747 = sbr.rel (0) target = $region41
    $region40: #{tpu_custom_call.1} parent=1 // pred_region
      %749 = vsyncadd [#allocation5], 0
      %s751 = sshll.u32 [#allocation4], 4
      %s752 = int_to_ptr.vmem [resolvable:$true] %s751
      %s753 = sshll.u32 %s7, 4
      %s754 = int_to_ptr.hbm [resolvable:$true] %s753
      %756 = dma.vmem_to_hbm [thread:$0]  %s752, 128, %s754, [#allocation5]
    $region41: #{tpu_custom_call.1} parent=1 // pred_fallthru
      _
    // Predicated region
    $region42: #{tpu_custom_call.1} parent=1 // pred_check
      _
    $region43: #{tpu_custom_call.1} parent=1 // pred_check_branch
      %758 = sbr.rel (0) target = $region45
    $region44: #{tpu_custom_call.1} parent=1 // pred_region
      %760 = vsyncadd [#allocation7], 0
      %s762 = sshll.u32 [#allocation6], 4
      %s763 = int_to_ptr.vmem [resolvable:$true] %s762
      %s764 = sshll.u32 %s8, 4
      %s765 = int_to_ptr.hbm [resolvable:$true] %s764
      %767 = dma.vmem_to_hbm [thread:$0]  %s763, 128, %s765, [#allocation7]
    $region45: #{tpu_custom_call.1} parent=1 // pred_fallthru
      _
    // Predicated region
    $region46: #{tpu_custom_call.1} parent=1 // pred_check
      _
    $region47: #{tpu_custom_call.1} parent=1 // pred_check_branch
      %769 = sbr.rel (0) target = $region49
    $region48: #{tpu_custom_call.1} parent=1 // pred_region
      %771 = vsyncadd [#allocation7], 0
      %s773 = sshll.u32 [#allocation8], 4
      %s774 = int_to_ptr.vmem [resolvable:$true] %s773
      %s775 = sshll.u32 %s9, 4
      %s776 = int_to_ptr.hbm [resolvable:$true] %s775
      %778 = dma.vmem_to_hbm [thread:$0]  %s774, 128, %s776, [#allocation7]
    $region49: #{tpu_custom_call.1} parent=1 // pred_fallthru
      _
    // Predicated region
    $region50: #{tpu_custom_call.1} parent=1 // pred_check
      _
    $region51: #{tpu_custom_call.1} parent=1 // pred_check_branch
      %780 = sbr.rel (0) target = $region53
    $region52: #{tpu_custom_call.1} parent=1 // pred_region
      %782 = dma.done [#allocation5], 128
    $region53: #{tpu_custom_call.1} parent=1 // pred_fallthru
      _
    // Predicated region
    $region54: #{tpu_custom_call.1} parent=1 // pred_check
      _
    $region55: #{tpu_custom_call.1} parent=1 // pred_check_branch
      %784 = sbr.rel (0) target = $region57
    $region56: #{tpu_custom_call.1} parent=1 // pred_region
      %786 = dma.done [#allocation7], 128
    $region57: #{tpu_custom_call.1} parent=1 // pred_fallthru
      _
    // Predicated region
    $region58: #{tpu_custom_call.1} parent=1 // pred_check
      _
    $region59: #{tpu_custom_call.1} parent=1 // pred_check_branch
      %788 = sbr.rel (0) target = $region61
    $region60: #{tpu_custom_call.1} parent=1 // pred_region
      %790 = dma.done [#allocation7], 128
    $region61: #{tpu_custom_call.1} parent=1 // pred_fallthru
      _
    %791 = vsyncpa [#allocation5], 1
    %792 = vsyncpa [#allocation7], 1

</llo_original>
